<compile_context>
chip_gen: v7x
topology: tpu7x:2x2x1
jax: 0.10.0
libtpu: 0.0.40
codegen_flags: <defaults>
</compile_context>

<pallas_src>
import math

import jax
import jax.numpy as jnp
from jax.experimental import pallas as pl
from jax.experimental.pallas import tpu as pltpu


def _round_up(x, m):
    return (x + m - 1) // m * m


def _even_cols_selector(width):
    """(width, width//2) 0/1 matrix with S[2j, j] = 1: compacts even columns."""
    rows = jax.lax.broadcasted_iota(jnp.int32, (width, width // 2), 0)
    cols = jax.lax.broadcasted_iota(jnp.int32, (width, width // 2), 1)
    return (rows == 2 * cols).astype(jnp.float32)


def vgg_feas_forward(x_nchw, params):
    """features = [conv(cin->c1)+ReLU, MaxPool2, conv(c1->c2)+ReLU, MaxPool2]."""
    (w1, b1), (w2, b2) = params
    n, cin, h, w = x_nchw.shape
    c1, c2 = w1.shape[0], w2.shape[0]
    assert h % 4 == 0 and w % 4 == 0, "two 2x2 pools require H, W % 4 == 0"
    assert c1 % 8 == 0 and c2 % 8 == 0

    # Padded in-channel counts: multiples of 16 for bf16 sublane packing.
    cp1 = _round_up(cin, 16)
    cp2 = _round_up(c1, 16)

    # ---- flat padded-layout bookkeeping (per image, all Python ints) -------
    hp1, wp1 = h + 2, w + 2
    f1 = hp1 * wp1                                   # padded conv1 input, flat
    m1 = _round_up((h - 1) * wp1 + w, 128)           # conv1 out width (128-mult)
    F1 = _round_up(max(f1, 2 * wp1 + 2 + m1), 128)   # image block lane width
    ho1, wo1 = h // 2, w // 2

    hp2, wp2 = ho1 + 2, wo1 + 2
    f2 = hp2 * wp2
    m2 = _round_up((ho1 - 1) * wp2 + wo1, 128)
    F2 = _round_up(max(f2, 2 * wp2 + 2 + m2), 128)
    ho2, wo2 = ho1 // 2, wo1 // 2
    out_flat = ho2 * wo2

    # ---- wrapper-side layout plumbing (cheap; NO tap materialization) ------
    xq = jnp.pad(x_nchw.astype(jnp.float32),
                 ((0, 0), (0, cp1 - cin), (1, 1), (1, 1)))     # (N,cp1,Hp1,Wp1)
    xq = xq.reshape(n, cp1, f1)
    xq = jnp.pad(xq, ((0, 0), (0, 0), (0, F1 - f1))).astype(jnp.bfloat16)

    w1m = jnp.pad(w1.astype(jnp.float32),
                  ((0, 0), (0, cp1 - cin), (0, 0), (0, 0)))    # (c1,cp1,3,3)
    w1m = jnp.transpose(w1m, (0, 2, 3, 1)).reshape(c1, 9 * cp1).astype(jnp.bfloat16)
    w2m = jnp.pad(w2.astype(jnp.float32),
                  ((0, 0), (0, cp2 - c1), (0, 0), (0, 0)))     # (c2,cp2,3,3)
    w2m = jnp.transpose(w2m, (0, 2, 3, 1)).reshape(c2, 9 * cp2).astype(jnp.bfloat16)
    b1c = b1.astype(jnp.float32).reshape(c1, 1)
    b2c = b2.astype(jnp.float32).reshape(c2, 1)

    def kernel(x_ref, w1_ref, b1_ref, w2_ref, b2_ref, o_ref,
               t1_ref, rs1_ref, z2_ref, t2_ref, rs2_ref):
        # ================= layer 1: conv 3x3 (pad=1) + ReLU ==================
        # Fold the 9 taps into K = 9*cp1: each tap is a static lane-offset
        # slice of the VMEM-resident padded image (unaligned lane slices lower
        # to XLU rotates), packed as bf16 and consumed by ONE MXU matmul.
        x = x_ref[0]                                       # (cp1, F1) bf16
        for t in range(9):
            dy, dx = divmod(t, 3)
            off = dy * wp1 + dx
            t1_ref[t * cp1:(t + 1) * cp1, :] = x[:, off:off + m1]
        y1 = jnp.dot(w1_ref[...], t1_ref[...],
                     preferred_element_type=jnp.float32)       # (c1, m1) f32
        y1 = jnp.maximum(y1 + b1_ref[...], 0.0)

        # ================= pool 1 (2x2 / stride 2) ===========================
        # Per pooled row: 4-way shifted max (VPU), stacked on sublanes; the
        # even columns are then compacted by a tiny in-kernel iota-generated
        # selector matmul and scattered into the zero-padded conv2 layout.
        # Invariant: only even (row, col) window anchors are ever selected, so
        # the garbage columns of the flat conv output never propagate.
        for i in range(ho1):
            base = 2 * i * wp1
            rs1_ref[i * c1:(i + 1) * c1, :] = jnp.maximum(
                jnp.maximum(y1[:, base:base + w],
                            y1[:, base + 1:base + 1 + w]),
                jnp.maximum(y1[:, base + wp1:base + wp1 + w],
                            y1[:, base + wp1 + 1:base + wp1 + 1 + w]))
        p1 = jnp.dot(rs1_ref[...], _even_cols_selector(w),
                     preferred_element_type=jnp.float32)       # (ho1*c1, wo1)
        z2_ref[...] = jnp.zeros_like(z2_ref)
        for i in range(ho1):
            z2_ref[0:c1, pl.ds((1 + i) * wp2 + 1, wo1)] = p1[i * c1:(i + 1) * c1, :]

        # ================= layer 2: conv 3x3 (pad=1) + ReLU ==================
        for t in range(9):
            dy, dx = divmod(t, 3)
            off = dy * wp2 + dx
            t2_ref[t * cp2:(t + 1) * cp2, :] = (
                z2_ref[:, pl.ds(off, m2)].astype(jnp.bfloat16))
        y2 = jnp.dot(w2_ref[...], t2_ref[...],
                     preferred_element_type=jnp.float32)       # (c2, m2) f32
        y2 = jnp.maximum(y2 + b2_ref[...], 0.0)

        # ================= pool 2 -> (c2, ho2*wo2) ===========================
        for i in range(ho2):
            base = 2 * i * wp2
            rs2_ref[i * c2:(i + 1) * c2, :] = jnp.maximum(
                jnp.maximum(y2[:, base:base + wo1],
                            y2[:, base + 1:base + 1 + wo1]),
                jnp.maximum(y2[:, base + wp2:base + wp2 + wo1],
                            y2[:, base + wp2 + 1:base + wp2 + 1 + wo1]))
        p2 = jnp.dot(rs2_ref[...], _even_cols_selector(wo1),
                     preferred_element_type=jnp.float32)       # (ho2*c2, wo2)
        for i in range(ho2):
            o_ref[0, :, pl.ds(i * wo2, wo2)] = p2[i * c2:(i + 1) * c2, :]

    out = pl.pallas_call(
        kernel,
        out_shape=jax.ShapeDtypeStruct((n, c2, out_flat), jnp.float32),
        grid_spec=pltpu.PrefetchScalarGridSpec(
            num_scalar_prefetch=0,
            grid=(n,),                                 # one image per grid step
            in_specs=[
                pl.BlockSpec((1, cp1, F1), lambda b: (b, 0, 0)),   # image
                # Grid-invariant operands (constant block index -> no refetch).
                pl.BlockSpec((c1, 9 * cp1), lambda b: (0, 0)),     # w1
                pl.BlockSpec((c1, 1), lambda b: (0, 0)),           # b1
                pl.BlockSpec((c2, 9 * cp2), lambda b: (0, 0)),     # w2
                pl.BlockSpec((c2, 1), lambda b: (0, 0)),           # b2
            ],
            out_specs=pl.BlockSpec((1, c2, out_flat), lambda b: (b, 0, 0)),
            scratch_shapes=[
                pltpu.VMEM((9 * cp1, m1), jnp.bfloat16),   # conv1 tap matrix
                pltpu.VMEM((ho1 * c1, w), jnp.float32),    # pool1 row stack
                pltpu.VMEM((cp2, F2), jnp.float32),        # conv2 padded input
                pltpu.VMEM((9 * cp2, m2), jnp.bfloat16),   # conv2 tap matrix
                pltpu.VMEM((ho2 * c2, wo1), jnp.float32),  # pool2 row stack
            ],
        ),
        compiler_params=pltpu.CompilerParams(
            dimension_semantics=("parallel",),         # shard images across TCs
            vmem_limit_bytes=32 * 1024 * 1024),
    )(xq, w1m, b1c, w2m, b2c)

    return out.reshape(n, c2, ho2, wo2)                # already NCHW


def init_params(key, cfg_channels, in_channels):
    """Replicates VGG_feas._initialize_weights for the Conv2d layers."""
    params = []
    cin = in_channels
    for cout in cfg_channels:
        key, sub = jax.random.split(key)
        fan = 3 * 3 * cout
        wk = jax.random.normal(sub, (cout, cin, 3, 3), jnp.float32) * math.sqrt(2.0 / fan)
        bk = jnp.zeros((cout,), jnp.float32)
        params.append((wk, bk))
        cin = cout
    return params


# ----------------------------------------------------------------------------
# Pure-JAX reference (correctness check of the Pallas path)
# ----------------------------------------------------------------------------
def _ref_forward(x_nchw, params):
    x = jnp.transpose(x_nchw, (0, 2, 3, 1)).astype(jnp.float32)
    for (wk, bk) in params:
        w_hwio = jnp.transpose(wk, (2, 3, 1, 0))
        x = jax.lax.conv_general_dilated(
            x, w_hwio, window_strides=(1, 1), padding="SAME",
            dimension_numbers=("NHWC", "HWIO", "NHWC"))
        x = jnp.maximum(x + bk, 0.0)
        x = jax.lax.reduce_window(
            x, -jnp.inf, jax.lax.max,
            window_dimensions=(1, 2, 2, 1),
            window_strides=(1, 2, 2, 1), padding="VALID")
    return jnp.transpose(x, (0, 3, 1, 2))


if __name__ == "__main__":
    key = jax.random.PRNGKey(0)
    key, kx = jax.random.split(key)

    # NCHW input, PyTorch convention: batch=2, channels=4, spatial=16.
    x = jax.random.normal(kx, (2, 4, 16, 16), jnp.float32)

    # Reduced VGG-style feature config [8, 'M', 16, 'M'] with in_channels=4.
    params = init_params(key, cfg_channels=[8, 16], in_channels=4)

    out = jax.block_until_ready(vgg_feas_forward(x, params))
    ref = jax.block_until_ready(_ref_forward(x, params))

    assert out.shape == (2, 16, 4, 4), out.shape
    # MXU operands are bf16 (per perf review); the tolerance covers two layers
    # of bf16 operand rounding relative to the pure-f32 reference.
    assert jnp.allclose(out, ref, atol=5e-2, rtol=5e-2), (
        float(jnp.max(jnp.abs(out - ref))))

    print("KERNEL_OK")
</pallas_src>

<mosaic_0001>
module attributes {stable_mosaic.version = 11 : i64} {
  func.func @kernel(%arg0: i32, %arg1: memref<1x16x512xbf16, #tpu.memory_space<vmem>>, %arg2: memref<8x144xbf16, #tpu.memory_space<vmem>>, %arg3: memref<8x1xf32, #tpu.memory_space<vmem>>, %arg4: memref<16x144xbf16, #tpu.memory_space<vmem>>, %arg5: memref<16x1xf32, #tpu.memory_space<vmem>>, %arg6: memref<1x16x16xf32, #tpu.memory_space<vmem>>, %arg7: memref<144x384xbf16, #tpu.memory_space<vmem>>, %arg8: memref<64x16xf32, #tpu.memory_space<vmem>>, %arg9: memref<16x256xf32, #tpu.memory_space<vmem>>, %arg10: memref<144x128xbf16, #tpu.memory_space<vmem>>, %arg11: memref<64x8xf32, #tpu.memory_space<vmem>>) attributes {dimension_semantics = [#tpu.dimension_semantics<parallel>], iteration_bounds = array<i64: 2>, scalar_prefetch = 0 : i64, scratch_operands = 5 : i64, tpu.core_type = #tpu.core_type<tc>, window_params = [{transform_indices = @transform_0, window_bounds = array<i64: 1, 16, 512>}, {pipeline_mode = #tpu.pipeline_mode<synchronous>, transform_indices = @transform_1, window_bounds = array<i64: 8, 144>}, {pipeline_mode = #tpu.pipeline_mode<synchronous>, transform_indices = @transform_2, window_bounds = array<i64: 8, 1>}, {pipeline_mode = #tpu.pipeline_mode<synchronous>, transform_indices = @transform_3, window_bounds = array<i64: 16, 144>}, {pipeline_mode = #tpu.pipeline_mode<synchronous>, transform_indices = @transform_4, window_bounds = array<i64: 16, 1>}, {transform_indices = @transform_5, window_bounds = array<i64: 1, 16, 16>}]} {
    %c0 = arith.constant 0 : index
    %c0_0 = arith.constant 0 : index
    %c0_1 = arith.constant 0 : index
    %0 = vector.load %arg1[%c0, %c0_0, %c0_1] : memref<1x16x512xbf16, #tpu.memory_space<vmem>>, vector<1x16x512xbf16>
    %1 = vector.shape_cast %0 : vector<1x16x512xbf16> to vector<16x512xbf16>
    %2 = vector.extract_strided_slice %1 {offsets = [0, 0], sizes = [16, 384], strides = [1, 1]} : vector<16x512xbf16> to vector<16x384xbf16>
    %c0_2 = arith.constant 0 : index
    %c0_3 = arith.constant 0 : index
    %3 = vector.load %arg7[%c0_2, %c0_3] : memref<144x384xbf16, #tpu.memory_space<vmem>>, vector<16x384xbf16>
    tpu.vector_store %arg7[%c0_2, %c0_3], %2 {strides = array<i32>} : memref<144x384xbf16, #tpu.memory_space<vmem>>, vector<16x384xbf16>,
    %4 = vector.extract_strided_slice %1 {offsets = [0, 1], sizes = [16, 384], strides = [1, 1]} : vector<16x512xbf16> to vector<16x384xbf16>
    %c16 = arith.constant 16 : index
    %c0_4 = arith.constant 0 : index
    %5 = vector.load %arg7[%c16, %c0_4] : memref<144x384xbf16, #tpu.memory_space<vmem>>, vector<16x384xbf16>
    tpu.vector_store %arg7[%c16, %c0_4], %4 {strides = array<i32>} : memref<144x384xbf16, #tpu.memory_space<vmem>>, vector<16x384xbf16>,
    %6 = vector.extract_strided_slice %1 {offsets = [0, 2], sizes = [16, 384], strides = [1, 1]} : vector<16x512xbf16> to vector<16x384xbf16>
    %c32 = arith.constant 32 : index
    %c0_5 = arith.constant 0 : index
    %7 = vector.load %arg7[%c32, %c0_5] : memref<144x384xbf16, #tpu.memory_space<vmem>>, vector<16x384xbf16>
    tpu.vector_store %arg7[%c32, %c0_5], %6 {strides = array<i32>} : memref<144x384xbf16, #tpu.memory_space<vmem>>, vector<16x384xbf16>,
    %8 = vector.extract_strided_slice %1 {offsets = [0, 18], sizes = [16, 384], strides = [1, 1]} : vector<16x512xbf16> to vector<16x384xbf16>
    %c48 = arith.constant 48 : index
    %c0_6 = arith.constant 0 : index
    %9 = vector.load %arg7[%c48, %c0_6] : memref<144x384xbf16, #tpu.memory_space<vmem>>, vector<16x384xbf16>
    tpu.vector_store %arg7[%c48, %c0_6], %8 {strides = array<i32>} : memref<144x384xbf16, #tpu.memory_space<vmem>>, vector<16x384xbf16>,
    %10 = vector.extract_strided_slice %1 {offsets = [0, 19], sizes = [16, 384], strides = [1, 1]} : vector<16x512xbf16> to vector<16x384xbf16>
    %c64 = arith.constant 64 : index
    %c0_7 = arith.constant 0 : index
    %11 = vector.load %arg7[%c64, %c0_7] : memref<144x384xbf16, #tpu.memory_space<vmem>>, vector<16x384xbf16>
    tpu.vector_store %arg7[%c64, %c0_7], %10 {strides = array<i32>} : memref<144x384xbf16, #tpu.memory_space<vmem>>, vector<16x384xbf16>,
    %12 = vector.extract_strided_slice %1 {offsets = [0, 20], sizes = [16, 384], strides = [1, 1]} : vector<16x512xbf16> to vector<16x384xbf16>
    %c80 = arith.constant 80 : index
    %c0_8 = arith.constant 0 : index
    %13 = vector.load %arg7[%c80, %c0_8] : memref<144x384xbf16, #tpu.memory_space<vmem>>, vector<16x384xbf16>
    tpu.vector_store %arg7[%c80, %c0_8], %12 {strides = array<i32>} : memref<144x384xbf16, #tpu.memory_space<vmem>>, vector<16x384xbf16>,
    %14 = vector.extract_strided_slice %1 {offsets = [0, 36], sizes = [16, 384], strides = [1, 1]} : vector<16x512xbf16> to vector<16x384xbf16>
    %c96 = arith.constant 96 : index
    %c0_9 = arith.constant 0 : index
    %15 = vector.load %arg7[%c96, %c0_9] : memref<144x384xbf16, #tpu.memory_space<vmem>>, vector<16x384xbf16>
    tpu.vector_store %arg7[%c96, %c0_9], %14 {strides = array<i32>} : memref<144x384xbf16, #tpu.memory_space<vmem>>, vector<16x384xbf16>,
    %16 = vector.extract_strided_slice %1 {offsets = [0, 37], sizes = [16, 384], strides = [1, 1]} : vector<16x512xbf16> to vector<16x384xbf16>
    %c112 = arith.constant 112 : index
    %c0_10 = arith.constant 0 : index
    %17 = vector.load %arg7[%c112, %c0_10] : memref<144x384xbf16, #tpu.memory_space<vmem>>, vector<16x384xbf16>
    tpu.vector_store %arg7[%c112, %c0_10], %16 {strides = array<i32>} : memref<144x384xbf16, #tpu.memory_space<vmem>>, vector<16x384xbf16>,
    %18 = vector.extract_strided_slice %1 {offsets = [0, 38], sizes = [16, 384], strides = [1, 1]} : vector<16x512xbf16> to vector<16x384xbf16>
    %c128 = arith.constant 128 : index
    %c0_11 = arith.constant 0 : index
    %19 = vector.load %arg7[%c128, %c0_11] : memref<144x384xbf16, #tpu.memory_space<vmem>>, vector<16x384xbf16>
    tpu.vector_store %arg7[%c128, %c0_11], %18 {strides = array<i32>} : memref<144x384xbf16, #tpu.memory_space<vmem>>, vector<16x384xbf16>,
    %c0_12 = arith.constant 0 : index
    %c0_13 = arith.constant 0 : index
    %20 = vector.load %arg2[%c0_12, %c0_13] : memref<8x144xbf16, #tpu.memory_space<vmem>>, vector<8x144xbf16>
    %c0_14 = arith.constant 0 : index
    %c0_15 = arith.constant 0 : index
    %21 = vector.load %arg7[%c0_14, %c0_15] : memref<144x384xbf16, #tpu.memory_space<vmem>>, vector<144x384xbf16>
    %cst = arith.constant dense<0.000000e+00> : vector<8x384xf32>
    %22 = tpu.matmul %20, %21, %cst {dimension_numbers = #tpu.dot_dimension_numbers<[1], [0], [0], [1], [0, 0, 1, 1], [], []>} : vector<8x144xbf16>, vector<144x384xbf16>, vector<8x384xf32> -> vector<8x384xf32>
    %c0_16 = arith.constant 0 : index
    %c0_17 = arith.constant 0 : index
    %23 = vector.load %arg3[%c0_16, %c0_17] : memref<8x1xf32, #tpu.memory_space<vmem>>, vector<8x1xf32>
    %24 = vector.broadcast %23 : vector<8x1xf32> to vector<8x384xf32>
    %25 = arith.addf %22, %24 : vector<8x384xf32>
    %cst_18 = arith.constant 0.000000e+00 : f32
    %26 = vector.broadcast %cst_18 : f32 to vector<8x384xf32>
    %27 = arith.maximumf %25, %26 : vector<8x384xf32>
    %28 = vector.extract_strided_slice %27 {offsets = [0, 0], sizes = [8, 16], strides = [1, 1]} : vector<8x384xf32> to vector<8x16xf32>
    %29 = vector.extract_strided_slice %27 {offsets = [0, 1], sizes = [8, 16], strides = [1, 1]} : vector<8x384xf32> to vector<8x16xf32>
    %30 = arith.maximumf %28, %29 : vector<8x16xf32>
    %31 = vector.extract_strided_slice %27 {offsets = [0, 18], sizes = [8, 16], strides = [1, 1]} : vector<8x384xf32> to vector<8x16xf32>
    %32 = vector.extract_strided_slice %27 {offsets = [0, 19], sizes = [8, 16], strides = [1, 1]} : vector<8x384xf32> to vector<8x16xf32>
    %33 = arith.maximumf %31, %32 : vector<8x16xf32>
    %34 = arith.maximumf %30, %33 : vector<8x16xf32>
    %c0_19 = arith.constant 0 : index
    %c0_20 = arith.constant 0 : index
    %35 = vector.load %arg8[%c0_19, %c0_20] : memref<64x16xf32, #tpu.memory_space<vmem>>, vector<8x16xf32>
    tpu.vector_store %arg8[%c0_19, %c0_20], %34 {strides = array<i32>} : memref<64x16xf32, #tpu.memory_space<vmem>>, vector<8x16xf32>,
    %36 = vector.extract_strided_slice %27 {offsets = [0, 36], sizes = [8, 16], strides = [1, 1]} : vector<8x384xf32> to vector<8x16xf32>
    %37 = vector.extract_strided_slice %27 {offsets = [0, 37], sizes = [8, 16], strides = [1, 1]} : vector<8x384xf32> to vector<8x16xf32>
    %38 = arith.maximumf %36, %37 : vector<8x16xf32>
    %39 = vector.extract_strided_slice %27 {offsets = [0, 54], sizes = [8, 16], strides = [1, 1]} : vector<8x384xf32> to vector<8x16xf32>
    %40 = vector.extract_strided_slice %27 {offsets = [0, 55], sizes = [8, 16], strides = [1, 1]} : vector<8x384xf32> to vector<8x16xf32>
    %41 = arith.maximumf %39, %40 : vector<8x16xf32>
    %42 = arith.maximumf %38, %41 : vector<8x16xf32>
    %c8 = arith.constant 8 : index
    %c0_21 = arith.constant 0 : index
    %43 = vector.load %arg8[%c8, %c0_21] : memref<64x16xf32, #tpu.memory_space<vmem>>, vector<8x16xf32>
    tpu.vector_store %arg8[%c8, %c0_21], %42 {strides = array<i32>} : memref<64x16xf32, #tpu.memory_space<vmem>>, vector<8x16xf32>,
    %44 = vector.extract_strided_slice %27 {offsets = [0, 72], sizes = [8, 16], strides = [1, 1]} : vector<8x384xf32> to vector<8x16xf32>
    %45 = vector.extract_strided_slice %27 {offsets = [0, 73], sizes = [8, 16], strides = [1, 1]} : vector<8x384xf32> to vector<8x16xf32>
    %46 = arith.maximumf %44, %45 : vector<8x16xf32>
    %47 = vector.extract_strided_slice %27 {offsets = [0, 90], sizes = [8, 16], strides = [1, 1]} : vector<8x384xf32> to vector<8x16xf32>
    %48 = vector.extract_strided_slice %27 {offsets = [0, 91], sizes = [8, 16], strides = [1, 1]} : vector<8x384xf32> to vector<8x16xf32>
    %49 = arith.maximumf %47, %48 : vector<8x16xf32>
    %50 = arith.maximumf %46, %49 : vector<8x16xf32>
    %c16_22 = arith.constant 16 : index
    %c0_23 = arith.constant 0 : index
    %51 = vector.load %arg8[%c16_22, %c0_23] : memref<64x16xf32, #tpu.memory_space<vmem>>, vector<8x16xf32>
    tpu.vector_store %arg8[%c16_22, %c0_23], %50 {strides = array<i32>} : memref<64x16xf32, #tpu.memory_space<vmem>>, vector<8x16xf32>,
    %52 = vector.extract_strided_slice %27 {offsets = [0, 108], sizes = [8, 16], strides = [1, 1]} : vector<8x384xf32> to vector<8x16xf32>
    %53 = vector.extract_strided_slice %27 {offsets = [0, 109], sizes = [8, 16], strides = [1, 1]} : vector<8x384xf32> to vector<8x16xf32>
    %54 = arith.maximumf %52, %53 : vector<8x16xf32>
    %55 = vector.extract_strided_slice %27 {offsets = [0, 126], sizes = [8, 16], strides = [1, 1]} : vector<8x384xf32> to vector<8x16xf32>
    %56 = vector.extract_strided_slice %27 {offsets = [0, 127], sizes = [8, 16], strides = [1, 1]} : vector<8x384xf32> to vector<8x16xf32>
    %57 = arith.maximumf %55, %56 : vector<8x16xf32>
    %58 = arith.maximumf %54, %57 : vector<8x16xf32>
    %c24 = arith.constant 24 : index
    %c0_24 = arith.constant 0 : index
    %59 = vector.load %arg8[%c24, %c0_24] : memref<64x16xf32, #tpu.memory_space<vmem>>, vector<8x16xf32>
    tpu.vector_store %arg8[%c24, %c0_24], %58 {strides = array<i32>} : memref<64x16xf32, #tpu.memory_space<vmem>>, vector<8x16xf32>,
    %60 = vector.extract_strided_slice %27 {offsets = [0, 144], sizes = [8, 16], strides = [1, 1]} : vector<8x384xf32> to vector<8x16xf32>
    %61 = vector.extract_strided_slice %27 {offsets = [0, 145], sizes = [8, 16], strides = [1, 1]} : vector<8x384xf32> to vector<8x16xf32>
    %62 = arith.maximumf %60, %61 : vector<8x16xf32>
    %63 = vector.extract_strided_slice %27 {offsets = [0, 162], sizes = [8, 16], strides = [1, 1]} : vector<8x384xf32> to vector<8x16xf32>
    %64 = vector.extract_strided_slice %27 {offsets = [0, 163], sizes = [8, 16], strides = [1, 1]} : vector<8x384xf32> to vector<8x16xf32>
    %65 = arith.maximumf %63, %64 : vector<8x16xf32>
    %66 = arith.maximumf %62, %65 : vector<8x16xf32>
    %c32_25 = arith.constant 32 : index
    %c0_26 = arith.constant 0 : index
    %67 = vector.load %arg8[%c32_25, %c0_26] : memref<64x16xf32, #tpu.memory_space<vmem>>, vector<8x16xf32>
    tpu.vector_store %arg8[%c32_25, %c0_26], %66 {strides = array<i32>} : memref<64x16xf32, #tpu.memory_space<vmem>>, vector<8x16xf32>,
    %68 = vector.extract_strided_slice %27 {offsets = [0, 180], sizes = [8, 16], strides = [1, 1]} : vector<8x384xf32> to vector<8x16xf32>
    %69 = vector.extract_strided_slice %27 {offsets = [0, 181], sizes = [8, 16], strides = [1, 1]} : vector<8x384xf32> to vector<8x16xf32>
    %70 = arith.maximumf %68, %69 : vector<8x16xf32>
    %71 = vector.extract_strided_slice %27 {offsets = [0, 198], sizes = [8, 16], strides = [1, 1]} : vector<8x384xf32> to vector<8x16xf32>
    %72 = vector.extract_strided_slice %27 {offsets = [0, 199], sizes = [8, 16], strides = [1, 1]} : vector<8x384xf32> to vector<8x16xf32>
    %73 = arith.maximumf %71, %72 : vector<8x16xf32>
    %74 = arith.maximumf %70, %73 : vector<8x16xf32>
    %c40 = arith.constant 40 : index
    %c0_27 = arith.constant 0 : index
    %75 = vector.load %arg8[%c40, %c0_27] : memref<64x16xf32, #tpu.memory_space<vmem>>, vector<8x16xf32>
    tpu.vector_store %arg8[%c40, %c0_27], %74 {strides = array<i32>} : memref<64x16xf32, #tpu.memory_space<vmem>>, vector<8x16xf32>,
    %76 = vector.extract_strided_slice %27 {offsets = [0, 216], sizes = [8, 16], strides = [1, 1]} : vector<8x384xf32> to vector<8x16xf32>
    %77 = vector.extract_strided_slice %27 {offsets = [0, 217], sizes = [8, 16], strides = [1, 1]} : vector<8x384xf32> to vector<8x16xf32>
    %78 = arith.maximumf %76, %77 : vector<8x16xf32>
    %79 = vector.extract_strided_slice %27 {offsets = [0, 234], sizes = [8, 16], strides = [1, 1]} : vector<8x384xf32> to vector<8x16xf32>
    %80 = vector.extract_strided_slice %27 {offsets = [0, 235], sizes = [8, 16], strides = [1, 1]} : vector<8x384xf32> to vector<8x16xf32>
    %81 = arith.maximumf %79, %80 : vector<8x16xf32>
    %82 = arith.maximumf %78, %81 : vector<8x16xf32>
    %c48_28 = arith.constant 48 : index
    %c0_29 = arith.constant 0 : index
    %83 = vector.load %arg8[%c48_28, %c0_29] : memref<64x16xf32, #tpu.memory_space<vmem>>, vector<8x16xf32>
    tpu.vector_store %arg8[%c48_28, %c0_29], %82 {strides = array<i32>} : memref<64x16xf32, #tpu.memory_space<vmem>>, vector<8x16xf32>,
    %84 = vector.extract_strided_slice %27 {offsets = [0, 252], sizes = [8, 16], strides = [1, 1]} : vector<8x384xf32> to vector<8x16xf32>
    %85 = vector.extract_strided_slice %27 {offsets = [0, 253], sizes = [8, 16], strides = [1, 1]} : vector<8x384xf32> to vector<8x16xf32>
    %86 = arith.maximumf %84, %85 : vector<8x16xf32>
    %87 = vector.extract_strided_slice %27 {offsets = [0, 270], sizes = [8, 16], strides = [1, 1]} : vector<8x384xf32> to vector<8x16xf32>
    %88 = vector.extract_strided_slice %27 {offsets = [0, 271], sizes = [8, 16], strides = [1, 1]} : vector<8x384xf32> to vector<8x16xf32>
    %89 = arith.maximumf %87, %88 : vector<8x16xf32>
    %90 = arith.maximumf %86, %89 : vector<8x16xf32>
    %c56 = arith.constant 56 : index
    %c0_30 = arith.constant 0 : index
    %91 = vector.load %arg8[%c56, %c0_30] : memref<64x16xf32, #tpu.memory_space<vmem>>, vector<8x16xf32>
    tpu.vector_store %arg8[%c56, %c0_30], %90 {strides = array<i32>} : memref<64x16xf32, #tpu.memory_space<vmem>>, vector<8x16xf32>,
    %c0_31 = arith.constant 0 : index
    %c0_32 = arith.constant 0 : index
    %92 = vector.load %arg8[%c0_31, %c0_32] : memref<64x16xf32, #tpu.memory_space<vmem>>, vector<64x16xf32>
    %93 = tpu.iota {dimensions = array<i32: 0>} : vector<16x8xi32>
    %94 = tpu.iota {dimensions = array<i32: 1>} : vector<16x8xi32>
    %c2_i32 = arith.constant 2 : i32
    %95 = vector.broadcast %c2_i32 : i32 to vector<16x8xi32>
    %96 = arith.muli %95, %94 : vector<16x8xi32>
    %97 = arith.cmpi eq, %93, %96 : vector<16x8xi32>
    %98 = arith.extui %97 : vector<16x8xi1> to vector<16x8xi32>
    %99 = arith.sitofp %98 : vector<16x8xi32> to vector<16x8xf32>
    %cst_33 = arith.constant dense<0.000000e+00> : vector<64x8xf32>
    %100 = tpu.matmul %92, %99, %cst_33 {dimension_numbers = #tpu.dot_dimension_numbers<[1], [0], [0], [1], [0, 0, 1, 1], [], []>} : vector<64x16xf32>, vector<16x8xf32>, vector<64x8xf32> -> vector<64x8xf32>
    %cst_34 = arith.constant 0.000000e+00 : f32
    %101 = vector.broadcast %cst_34 : f32 to vector<16x256xf32>
    %c0_35 = arith.constant 0 : index
    %c0_36 = arith.constant 0 : index
    %102 = vector.load %arg9[%c0_35, %c0_36] : memref<16x256xf32, #tpu.memory_space<vmem>>, vector<16x256xf32>
    tpu.vector_store %arg9[%c0_35, %c0_36], %101 {strides = array<i32>} : memref<16x256xf32, #tpu.memory_space<vmem>>, vector<16x256xf32>,
    %103 = vector.extract_strided_slice %100 {offsets = [0, 0], sizes = [8, 8], strides = [1, 1]} : vector<64x8xf32> to vector<8x8xf32>
    %c0_37 = arith.constant 0 : index
    %c11 = arith.constant 11 : index
    %104 = vector.load %arg9[%c0_37, %c11] : memref<16x256xf32, #tpu.memory_space<vmem>>, vector<8x8xf32>
    tpu.vector_store %arg9[%c0_37, %c11], %103 {strides = array<i32>} : memref<16x256xf32, #tpu.memory_space<vmem>>, vector<8x8xf32>,
    %105 = vector.extract_strided_slice %100 {offsets = [8, 0], sizes = [8, 8], strides = [1, 1]} : vector<64x8xf32> to vector<8x8xf32>
    %c0_38 = arith.constant 0 : index
    %c21 = arith.constant 21 : index
    %106 = vector.load %arg9[%c0_38, %c21] : memref<16x256xf32, #tpu.memory_space<vmem>>, vector<8x8xf32>
    tpu.vector_store %arg9[%c0_38, %c21], %105 {strides = array<i32>} : memref<16x256xf32, #tpu.memory_space<vmem>>, vector<8x8xf32>,
    %107 = vector.extract_strided_slice %100 {offsets = [16, 0], sizes = [8, 8], strides = [1, 1]} : vector<64x8xf32> to vector<8x8xf32>
    %c0_39 = arith.constant 0 : index
    %c31 = arith.constant 31 : index
    %108 = vector.load %arg9[%c0_39, %c31] : memref<16x256xf32, #tpu.memory_space<vmem>>, vector<8x8xf32>
    tpu.vector_store %arg9[%c0_39, %c31], %107 {strides = array<i32>} : memref<16x256xf32, #tpu.memory_space<vmem>>, vector<8x8xf32>,
    %109 = vector.extract_strided_slice %100 {offsets = [24, 0], sizes = [8, 8], strides = [1, 1]} : vector<64x8xf32> to vector<8x8xf32>
    %c0_40 = arith.constant 0 : index
    %c41 = arith.constant 41 : index
    %110 = vector.load %arg9[%c0_40, %c41] : memref<16x256xf32, #tpu.memory_space<vmem>>, vector<8x8xf32>
    tpu.vector_store %arg9[%c0_40, %c41], %109 {strides = array<i32>} : memref<16x256xf32, #tpu.memory_space<vmem>>, vector<8x8xf32>,
    %111 = vector.extract_strided_slice %100 {offsets = [32, 0], sizes = [8, 8], strides = [1, 1]} : vector<64x8xf32> to vector<8x8xf32>
    %c0_41 = arith.constant 0 : index
    %c51 = arith.constant 51 : index
    %112 = vector.load %arg9[%c0_41, %c51] : memref<16x256xf32, #tpu.memory_space<vmem>>, vector<8x8xf32>
    tpu.vector_store %arg9[%c0_41, %c51], %111 {strides = array<i32>} : memref<16x256xf32, #tpu.memory_space<vmem>>, vector<8x8xf32>,
    %113 = vector.extract_strided_slice %100 {offsets = [40, 0], sizes = [8, 8], strides = [1, 1]} : vector<64x8xf32> to vector<8x8xf32>
    %c0_42 = arith.constant 0 : index
    %c61 = arith.constant 61 : index
    %114 = vector.load %arg9[%c0_42, %c61] : memref<16x256xf32, #tpu.memory_space<vmem>>, vector<8x8xf32>
    tpu.vector_store %arg9[%c0_42, %c61], %113 {strides = array<i32>} : memref<16x256xf32, #tpu.memory_space<vmem>>, vector<8x8xf32>,
    %115 = vector.extract_strided_slice %100 {offsets = [48, 0], sizes = [8, 8], strides = [1, 1]} : vector<64x8xf32> to vector<8x8xf32>
    %c0_43 = arith.constant 0 : index
    %c71 = arith.constant 71 : index
    %116 = vector.load %arg9[%c0_43, %c71] : memref<16x256xf32, #tpu.memory_space<vmem>>, vector<8x8xf32>
    tpu.vector_store %arg9[%c0_43, %c71], %115 {strides = array<i32>} : memref<16x256xf32, #tpu.memory_space<vmem>>, vector<8x8xf32>,
    %117 = vector.extract_strided_slice %100 {offsets = [56, 0], sizes = [8, 8], strides = [1, 1]} : vector<64x8xf32> to vector<8x8xf32>
    %c0_44 = arith.constant 0 : index
    %c81 = arith.constant 81 : index
    %118 = vector.load %arg9[%c0_44, %c81] : memref<16x256xf32, #tpu.memory_space<vmem>>, vector<8x8xf32>
    tpu.vector_store %arg9[%c0_44, %c81], %117 {strides = array<i32>} : memref<16x256xf32, #tpu.memory_space<vmem>>, vector<8x8xf32>,
    %c0_45 = arith.constant 0 : index
    %c0_46 = arith.constant 0 : index
    %119 = vector.load %arg9[%c0_45, %c0_46] : memref<16x256xf32, #tpu.memory_space<vmem>>, vector<16x128xf32>
    %120 = arith.truncf %119 : vector<16x128xf32> to vector<16x128xbf16>
    %c0_47 = arith.constant 0 : index
    %c0_48 = arith.constant 0 : index
    %121 = vector.load %arg10[%c0_47, %c0_48] : memref<144x128xbf16, #tpu.memory_space<vmem>>, vector<16x128xbf16>
    tpu.vector_store %arg10[%c0_47, %c0_48], %120 {strides = array<i32>} : memref<144x128xbf16, #tpu.memory_space<vmem>>, vector<16x128xbf16>,
    %c0_49 = arith.constant 0 : index
    %c1 = arith.constant 1 : index
    %122 = vector.load %arg9[%c0_49, %c1] : memref<16x256xf32, #tpu.memory_space<vmem>>, vector<16x128xf32>
    %123 = arith.truncf %122 : vector<16x128xf32> to vector<16x128xbf16>
    %c16_50 = arith.constant 16 : index
    %c0_51 = arith.constant 0 : index
    %124 = vector.load %arg10[%c16_50, %c0_51] : memref<144x128xbf16, #tpu.memory_space<vmem>>, vector<16x128xbf16>
    tpu.vector_store %arg10[%c16_50, %c0_51], %123 {strides = array<i32>} : memref<144x128xbf16, #tpu.memory_space<vmem>>, vector<16x128xbf16>,
    %c0_52 = arith.constant 0 : index
    %c2 = arith.constant 2 : index
    %125 = vector.load %arg9[%c0_52, %c2] : memref<16x256xf32, #tpu.memory_space<vmem>>, vector<16x128xf32>
    %126 = arith.truncf %125 : vector<16x128xf32> to vector<16x128xbf16>
    %c32_53 = arith.constant 32 : index
    %c0_54 = arith.constant 0 : index
    %127 = vector.load %arg10[%c32_53, %c0_54] : memref<144x128xbf16, #tpu.memory_space<vmem>>, vector<16x128xbf16>
    tpu.vector_store %arg10[%c32_53, %c0_54], %126 {strides = array<i32>} : memref<144x128xbf16, #tpu.memory_space<vmem>>, vector<16x128xbf16>,
    %c0_55 = arith.constant 0 : index
    %c10 = arith.constant 10 : index
    %128 = vector.load %arg9[%c0_55, %c10] : memref<16x256xf32, #tpu.memory_space<vmem>>, vector<16x128xf32>
    %129 = arith.truncf %128 : vector<16x128xf32> to vector<16x128xbf16>
    %c48_56 = arith.constant 48 : index
    %c0_57 = arith.constant 0 : index
    %130 = vector.load %arg10[%c48_56, %c0_57] : memref<144x128xbf16, #tpu.memory_space<vmem>>, vector<16x128xbf16>
    tpu.vector_store %arg10[%c48_56, %c0_57], %129 {strides = array<i32>} : memref<144x128xbf16, #tpu.memory_space<vmem>>, vector<16x128xbf16>,
    %c0_58 = arith.constant 0 : index
    %c11_59 = arith.constant 11 : index
    %131 = vector.load %arg9[%c0_58, %c11_59] : memref<16x256xf32, #tpu.memory_space<vmem>>, vector<16x128xf32>
    %132 = arith.truncf %131 : vector<16x128xf32> to vector<16x128xbf16>
    %c64_60 = arith.constant 64 : index
    %c0_61 = arith.constant 0 : index
    %133 = vector.load %arg10[%c64_60, %c0_61] : memref<144x128xbf16, #tpu.memory_space<vmem>>, vector<16x128xbf16>
    tpu.vector_store %arg10[%c64_60, %c0_61], %132 {strides = array<i32>} : memref<144x128xbf16, #tpu.memory_space<vmem>>, vector<16x128xbf16>,
    %c0_62 = arith.constant 0 : index
    %c12 = arith.constant 12 : index
    %134 = vector.load %arg9[%c0_62, %c12] : memref<16x256xf32, #tpu.memory_space<vmem>>, vector<16x128xf32>
    %135 = arith.truncf %134 : vector<16x128xf32> to vector<16x128xbf16>
    %c80_63 = arith.constant 80 : index
    %c0_64 = arith.constant 0 : index
    %136 = vector.load %arg10[%c80_63, %c0_64] : memref<144x128xbf16, #tpu.memory_space<vmem>>, vector<16x128xbf16>
    tpu.vector_store %arg10[%c80_63, %c0_64], %135 {strides = array<i32>} : memref<144x128xbf16, #tpu.memory_space<vmem>>, vector<16x128xbf16>,
    %c0_65 = arith.constant 0 : index
    %c20 = arith.constant 20 : index
    %137 = vector.load %arg9[%c0_65, %c20] : memref<16x256xf32, #tpu.memory_space<vmem>>, vector<16x128xf32>
    %138 = arith.truncf %137 : vector<16x128xf32> to vector<16x128xbf16>
    %c96_66 = arith.constant 96 : index
    %c0_67 = arith.constant 0 : index
    %139 = vector.load %arg10[%c96_66, %c0_67] : memref<144x128xbf16, #tpu.memory_space<vmem>>, vector<16x128xbf16>
    tpu.vector_store %arg10[%c96_66, %c0_67], %138 {strides = array<i32>} : memref<144x128xbf16, #tpu.memory_space<vmem>>, vector<16x128xbf16>,
    %c0_68 = arith.constant 0 : index
    %c21_69 = arith.constant 21 : index
    %140 = vector.load %arg9[%c0_68, %c21_69] : memref<16x256xf32, #tpu.memory_space<vmem>>, vector<16x128xf32>
    %141 = arith.truncf %140 : vector<16x128xf32> to vector<16x128xbf16>
    %c112_70 = arith.constant 112 : index
    %c0_71 = arith.constant 0 : index
    %142 = vector.load %arg10[%c112_70, %c0_71] : memref<144x128xbf16, #tpu.memory_space<vmem>>, vector<16x128xbf16>
    tpu.vector_store %arg10[%c112_70, %c0_71], %141 {strides = array<i32>} : memref<144x128xbf16, #tpu.memory_space<vmem>>, vector<16x128xbf16>,
    %c0_72 = arith.constant 0 : index
    %c22 = arith.constant 22 : index
    %143 = vector.load %arg9[%c0_72, %c22] : memref<16x256xf32, #tpu.memory_space<vmem>>, vector<16x128xf32>
    %144 = arith.truncf %143 : vector<16x128xf32> to vector<16x128xbf16>
    %c128_73 = arith.constant 128 : index
    %c0_74 = arith.constant 0 : index
    %145 = vector.load %arg10[%c128_73, %c0_74] : memref<144x128xbf16, #tpu.memory_space<vmem>>, vector<16x128xbf16>
    tpu.vector_store %arg10[%c128_73, %c0_74], %144 {strides = array<i32>} : memref<144x128xbf16, #tpu.memory_space<vmem>>, vector<16x128xbf16>,
    %c0_75 = arith.constant 0 : index
    %c0_76 = arith.constant 0 : index
    %146 = vector.load %arg4[%c0_75, %c0_76] : memref<16x144xbf16, #tpu.memory_space<vmem>>, vector<16x144xbf16>
    %c0_77 = arith.constant 0 : index
    %c0_78 = arith.constant 0 : index
    %147 = vector.load %arg10[%c0_77, %c0_78] : memref<144x128xbf16, #tpu.memory_space<vmem>>, vector<144x128xbf16>
    %cst_79 = arith.constant dense<0.000000e+00> : vector<16x128xf32>
    %148 = tpu.matmul %146, %147, %cst_79 {dimension_numbers = #tpu.dot_dimension_numbers<[1], [0], [0], [1], [0, 0, 1, 1], [], []>} : vector<16x144xbf16>, vector<144x128xbf16>, vector<16x128xf32> -> vector<16x128xf32>
    %c0_80 = arith.constant 0 : index
    %c0_81 = arith.constant 0 : index
    %149 = vector.load %arg5[%c0_80, %c0_81] : memref<16x1xf32, #tpu.memory_space<vmem>>, vector<16x1xf32>
    %150 = vector.broadcast %149 : vector<16x1xf32> to vector<16x128xf32>
    %151 = arith.addf %148, %150 : vector<16x128xf32>
    %cst_82 = arith.constant 0.000000e+00 : f32
    %152 = vector.broadcast %cst_82 : f32 to vector<16x128xf32>
    %153 = arith.maximumf %151, %152 : vector<16x128xf32>
    %154 = vector.extract_strided_slice %153 {offsets = [0, 0], sizes = [16, 8], strides = [1, 1]} : vector<16x128xf32> to vector<16x8xf32>
    %155 = vector.extract_strided_slice %153 {offsets = [0, 1], sizes = [16, 8], strides = [1, 1]} : vector<16x128xf32> to vector<16x8xf32>
    %156 = arith.maximumf %154, %155 : vector<16x8xf32>
    %157 = vector.extract_strided_slice %153 {offsets = [0, 10], sizes = [16, 8], strides = [1, 1]} : vector<16x128xf32> to vector<16x8xf32>
    %158 = vector.extract_strided_slice %153 {offsets = [0, 11], sizes = [16, 8], strides = [1, 1]} : vector<16x128xf32> to vector<16x8xf32>
    %159 = arith.maximumf %157, %158 : vector<16x8xf32>
    %160 = arith.maximumf %156, %159 : vector<16x8xf32>
    %c0_83 = arith.constant 0 : index
    %c0_84 = arith.constant 0 : index
    %161 = vector.load %arg11[%c0_83, %c0_84] : memref<64x8xf32, #tpu.memory_space<vmem>>, vector<16x8xf32>
    tpu.vector_store %arg11[%c0_83, %c0_84], %160 {strides = array<i32>} : memref<64x8xf32, #tpu.memory_space<vmem>>, vector<16x8xf32>,
    %162 = vector.extract_strided_slice %153 {offsets = [0, 20], sizes = [16, 8], strides = [1, 1]} : vector<16x128xf32> to vector<16x8xf32>
    %163 = vector.extract_strided_slice %153 {offsets = [0, 21], sizes = [16, 8], strides = [1, 1]} : vector<16x128xf32> to vector<16x8xf32>
    %164 = arith.maximumf %162, %163 : vector<16x8xf32>
    %165 = vector.extract_strided_slice %153 {offsets = [0, 30], sizes = [16, 8], strides = [1, 1]} : vector<16x128xf32> to vector<16x8xf32>
    %166 = vector.extract_strided_slice %153 {offsets = [0, 31], sizes = [16, 8], strides = [1, 1]} : vector<16x128xf32> to vector<16x8xf32>
    %167 = arith.maximumf %165, %166 : vector<16x8xf32>
    %168 = arith.maximumf %164, %167 : vector<16x8xf32>
    %c16_85 = arith.constant 16 : index
    %c0_86 = arith.constant 0 : index
    %169 = vector.load %arg11[%c16_85, %c0_86] : memref<64x8xf32, #tpu.memory_space<vmem>>, vector<16x8xf32>
    tpu.vector_store %arg11[%c16_85, %c0_86], %168 {strides = array<i32>} : memref<64x8xf32, #tpu.memory_space<vmem>>, vector<16x8xf32>,
    %170 = vector.extract_strided_slice %153 {offsets = [0, 40], sizes = [16, 8], strides = [1, 1]} : vector<16x128xf32> to vector<16x8xf32>
    %171 = vector.extract_strided_slice %153 {offsets = [0, 41], sizes = [16, 8], strides = [1, 1]} : vector<16x128xf32> to vector<16x8xf32>
    %172 = arith.maximumf %170, %171 : vector<16x8xf32>
    %173 = vector.extract_strided_slice %153 {offsets = [0, 50], sizes = [16, 8], strides = [1, 1]} : vector<16x128xf32> to vector<16x8xf32>
    %174 = vector.extract_strided_slice %153 {offsets = [0, 51], sizes = [16, 8], strides = [1, 1]} : vector<16x128xf32> to vector<16x8xf32>
    %175 = arith.maximumf %173, %174 : vector<16x8xf32>
    %176 = arith.maximumf %172, %175 : vector<16x8xf32>
    %c32_87 = arith.constant 32 : index
    %c0_88 = arith.constant 0 : index
    %177 = vector.load %arg11[%c32_87, %c0_88] : memref<64x8xf32, #tpu.memory_space<vmem>>, vector<16x8xf32>
    tpu.vector_store %arg11[%c32_87, %c0_88], %176 {strides = array<i32>} : memref<64x8xf32, #tpu.memory_space<vmem>>, vector<16x8xf32>,
    %178 = vector.extract_strided_slice %153 {offsets = [0, 60], sizes = [16, 8], strides = [1, 1]} : vector<16x128xf32> to vector<16x8xf32>
    %179 = vector.extract_strided_slice %153 {offsets = [0, 61], sizes = [16, 8], strides = [1, 1]} : vector<16x128xf32> to vector<16x8xf32>
    %180 = arith.maximumf %178, %179 : vector<16x8xf32>
    %181 = vector.extract_strided_slice %153 {offsets = [0, 70], sizes = [16, 8], strides = [1, 1]} : vector<16x128xf32> to vector<16x8xf32>
    %182 = vector.extract_strided_slice %153 {offsets = [0, 71], sizes = [16, 8], strides = [1, 1]} : vector<16x128xf32> to vector<16x8xf32>
    %183 = arith.maximumf %181, %182 : vector<16x8xf32>
    %184 = arith.maximumf %180, %183 : vector<16x8xf32>
    %c48_89 = arith.constant 48 : index
    %c0_90 = arith.constant 0 : index
    %185 = vector.load %arg11[%c48_89, %c0_90] : memref<64x8xf32, #tpu.memory_space<vmem>>, vector<16x8xf32>
    tpu.vector_store %arg11[%c48_89, %c0_90], %184 {strides = array<i32>} : memref<64x8xf32, #tpu.memory_space<vmem>>, vector<16x8xf32>,
    %c0_91 = arith.constant 0 : index
    %c0_92 = arith.constant 0 : index
    %186 = vector.load %arg11[%c0_91, %c0_92] : memref<64x8xf32, #tpu.memory_space<vmem>>, vector<64x8xf32>
    %187 = tpu.iota {dimensions = array<i32: 0>} : vector<8x4xi32>
    %188 = tpu.iota {dimensions = array<i32: 1>} : vector<8x4xi32>
    %c2_i32_93 = arith.constant 2 : i32
    %189 = vector.broadcast %c2_i32_93 : i32 to vector<8x4xi32>
    %190 = arith.muli %189, %188 : vector<8x4xi32>
    %191 = arith.cmpi eq, %187, %190 : vector<8x4xi32>
    %192 = arith.extui %191 : vector<8x4xi1> to vector<8x4xi32>
    %193 = arith.sitofp %192 : vector<8x4xi32> to vector<8x4xf32>
    %cst_94 = arith.constant dense<0.000000e+00> : vector<64x4xf32>
    %194 = tpu.matmul %186, %193, %cst_94 {dimension_numbers = #tpu.dot_dimension_numbers<[1], [0], [0], [1], [0, 0, 1, 1], [], []>} : vector<64x8xf32>, vector<8x4xf32>, vector<64x4xf32> -> vector<64x4xf32>
    %195 = vector.extract_strided_slice %194 {offsets = [0, 0], sizes = [16, 4], strides = [1, 1]} : vector<64x4xf32> to vector<16x4xf32>
    %c0_95 = arith.constant 0 : index
    %c0_96 = arith.constant 0 : index
    %c0_97 = arith.constant 0 : index
    %196 = vector.load %arg6[%c0_95, %c0_96, %c0_97] : memref<1x16x16xf32, #tpu.memory_space<vmem>>, vector<1x16x4xf32>
    %197 = vector.shape_cast %196 : vector<1x16x4xf32> to vector<16x4xf32>
    %198 = vector.shape_cast %195 : vector<16x4xf32> to vector<1x16x4xf32>
    tpu.vector_store %arg6[%c0_95, %c0_96, %c0_97], %198 {strides = array<i32>} : memref<1x16x16xf32, #tpu.memory_space<vmem>>, vector<1x16x4xf32>,
    %199 = vector.extract_strided_slice %194 {offsets = [16, 0], sizes = [16, 4], strides = [1, 1]} : vector<64x4xf32> to vector<16x4xf32>
    %c0_98 = arith.constant 0 : index
    %c0_99 = arith.constant 0 : index
    %c4 = arith.constant 4 : index
    %200 = vector.load %arg6[%c0_98, %c0_99, %c4] : memref<1x16x16xf32, #tpu.memory_space<vmem>>, vector<1x16x4xf32>
    %201 = vector.shape_cast %200 : vector<1x16x4xf32> to vector<16x4xf32>
    %202 = vector.shape_cast %199 : vector<16x4xf32> to vector<1x16x4xf32>
    tpu.vector_store %arg6[%c0_98, %c0_99, %c4], %202 {strides = array<i32>} : memref<1x16x16xf32, #tpu.memory_space<vmem>>, vector<1x16x4xf32>,
    %203 = vector.extract_strided_slice %194 {offsets = [32, 0], sizes = [16, 4], strides = [1, 1]} : vector<64x4xf32> to vector<16x4xf32>
    %c0_100 = arith.constant 0 : index
    %c0_101 = arith.constant 0 : index
    %c8_102 = arith.constant 8 : index
    %204 = vector.load %arg6[%c0_100, %c0_101, %c8_102] : memref<1x16x16xf32, #tpu.memory_space<vmem>>, vector<1x16x4xf32>
    %205 = vector.shape_cast %204 : vector<1x16x4xf32> to vector<16x4xf32>
    %206 = vector.shape_cast %203 : vector<16x4xf32> to vector<1x16x4xf32>
    tpu.vector_store %arg6[%c0_100, %c0_101, %c8_102], %206 {strides = array<i32>} : memref<1x16x16xf32, #tpu.memory_space<vmem>>, vector<1x16x4xf32>,
    %207 = vector.extract_strided_slice %194 {offsets = [48, 0], sizes = [16, 4], strides = [1, 1]} : vector<64x4xf32> to vector<16x4xf32>
    %c0_103 = arith.constant 0 : index
    %c0_104 = arith.constant 0 : index
    %c12_105 = arith.constant 12 : index
    %208 = vector.load %arg6[%c0_103, %c0_104, %c12_105] : memref<1x16x16xf32, #tpu.memory_space<vmem>>, vector<1x16x4xf32>
    %209 = vector.shape_cast %208 : vector<1x16x4xf32> to vector<16x4xf32>
    %210 = vector.shape_cast %207 : vector<16x4xf32> to vector<1x16x4xf32>
    tpu.vector_store %arg6[%c0_103, %c0_104, %c12_105], %210 {strides = array<i32>} : memref<1x16x16xf32, #tpu.memory_space<vmem>>, vector<1x16x4xf32>,
    return
  }
  func.func @transform_0(%arg0: i32) -> (i32, i32, i32) {
    %c0_i32 = arith.constant 0 : i32
    %c0_i32_0 = arith.constant 0 : i32
    %c0_i32_1 = arith.constant 0 : i32
    return %arg0, %c0_i32, %c0_i32_0 : i32, i32, i32
  }
  func.func @transform_1(%arg0: i32) -> (i32, i32) {
    %c0_i32 = arith.constant 0 : i32
    %c0_i32_0 = arith.constant 0 : i32
    %c0_i32_1 = arith.constant 0 : i32
    return %c0_i32, %c0_i32_0 : i32, i32
  }
  func.func @transform_2(%arg0: i32) -> (i32, i32) {
    %c0_i32 = arith.constant 0 : i32
    %c0_i32_0 = arith.constant 0 : i32
    %c0_i32_1 = arith.constant 0 : i32
    return %c0_i32, %c0_i32_0 : i32, i32
  }
  func.func @transform_3(%arg0: i32) -> (i32, i32) {
    %c0_i32 = arith.constant 0 : i32
    %c0_i32_0 = arith.constant 0 : i32
    %c0_i32_1 = arith.constant 0 : i32
    return %c0_i32, %c0_i32_0 : i32, i32
  }
  func.func @transform_4(%arg0: i32) -> (i32, i32) {
    %c0_i32 = arith.constant 0 : i32
    %c0_i32_0 = arith.constant 0 : i32
    %c0_i32_1 = arith.constant 0 : i32
    return %c0_i32, %c0_i32_0 : i32, i32
  }
  func.func @transform_5(%arg0: i32) -> (i32, i32, i32) {
    %c0_i32 = arith.constant 0 : i32
    %c0_i32_0 = arith.constant 0 : i32
    %c0_i32_1 = arith.constant 0 : i32
    return %arg0, %c0_i32, %c0_i32_0 : i32, i32, i32
  }
}

</mosaic_0001>

<llo_original>
// kernel: tpu_custom_call.1
$region0: #{tpu_custom_call.1}
  #allocation0 [shape = 'u32[]', space=smem, size = 0x4, offset = 0x4, fixed_abs, tag = 'smem constant byte address 0x4 - core index']
  #allocation1 [shape = 'u32[144,128]{1,0:T(1,128)}', space=vmem, size = 0x12000, scoped, tag = 'internal scratch']
  #allocation2 [shape = 'bf16[144,384]{1,0:T(16,128)(2,1)}', space=vmem, size = 0x1b000, scoped, tag = 'scratch operand']
  #allocation3 [shape = 'f32[64,16]{1,0:T(8,128)}', space=vmem, size = 0x8000, scoped, tag = 'scratch operand']
  #allocation4 [shape = 'f32[16,256]{1,0:T(8,128)}', space=vmem, size = 0x4000, scoped, tag = 'scratch operand']
  #allocation5 [shape = 'bf16[144,128]{1,0:T(16,128)(2,1)}', space=vmem, size = 0x9000, scoped, tag = 'scratch operand']
  #allocation6 [shape = 'f32[64,8]{1,0:T(8,128)}', space=vmem, size = 0x8000, scoped, tag = 'scratch operand']
  %s0 = inlined_call_operand.hbm [shape: bf16[2,16,512], index: 0, kind: input, shape index: {}]
  %s1 = inlined_call_operand.vmem [shape: bf16[8,144], index: 1, kind: input, shape index: {}]
  %s2 = inlined_call_operand.vmem [shape: f32[8,1], index: 2, kind: input, shape index: {}]
  %s3 = inlined_call_operand.vmem [shape: bf16[16,144], index: 3, kind: input, shape index: {}]
  %s4 = inlined_call_operand.vmem [shape: f32[16,1], index: 4, kind: input, shape index: {}]
  %s5 = inlined_call_operand.hbm [shape: f32[2,16,16], index: 5, kind: output, shape index: {}]
  %s6 = sld [smem:[#allocation0]]
  $region57: #{tpu_custom_call.1} parent=0
    _
  %s8 = ssub.s32 1, %s6
  %s9 = scalar_select 0, %s8, %s6
  $region1: #{tpu_custom_call.1} parent=0
    #allocation7 [shape = 'u8[32768]{0}', space=vmem, size = 0x8000, scoped, tag = 'input window, operand 0']
    #allocation8 [shape = 's32[2]{0}', space=sflag, size = 0x8, scoped, tag = 'scoped memory for tpu_custom_call.1']
    #allocation9 [shape = 's32[2]{0}', space=sflag, size = 0x8, scoped, tag = 'scoped memory for tpu_custom_call.1']
    #allocation10 [shape = 'u8[16384]{0}', space=vmem, size = 0x4000, scoped, tag = 'output window, operand 0']
    %10 = vsyncpa [#allocation8], 0
    %s11 = scalar_lea.sflag [#allocation8], 1
    %12 = vsyncpa %s11, 0
    %13 = vsyncpa [#allocation9], 0
    %s14 = scalar_lea.sflag [#allocation9], 1
    %15 = vsyncpa %s14, 0
    loop: start=0, step=1, limit=4
    $region2: #{tpu_custom_call.1} parent=1 // loop_pre_header
      _
    $region3: #{tpu_custom_call.1} parent=1 // loop_header
      %s17 = sphi 0, %s21
      %p18 = scmp.ge.s32.totalorder %s17, 4
      %s27 = sphi 0, %s29
      %s30 = sphi 0, %s27
      %s31 = sphi 0, %s30
      %s47 = sphi 0, %s31
      %s51 = sphi 0, %s51
      %s53 = sphi 0, %s51
      %s54 = sphi 0, %s53
      %s68 = sphi 0, %s54
      %s72 = sphi 0, %s72
      %s74 = sphi 0, %s72
      %s75 = sphi 0, %s74
      %s89 = sphi 0, %s75
      %s93 = sphi 0, %s93
      %s95 = sphi 0, %s93
      %s96 = sphi 0, %s95
      %s110 = sphi 0, %s96
      %s114 = sphi 0, %s114
      %s116 = sphi 0, %s114
      %s117 = sphi 0, %s116
      %s131 = sphi 0, %s117
      %s137 = sphi 0, %s139
      %s140 = sphi 0, %s137
      %s141 = sphi 0, %s140
      %s157 = sphi 0, %s141
    $region4: #{tpu_custom_call.1} parent=1 // loop_header_branch
      %20 = sbr.rel (%p18) target = $region8
    $region5: #{tpu_custom_call.1} parent=1 // loop_body
      %s22 = ssub.s32 %s17, 1
      %s23 = ssub.s32 %s17, 2
      %s24 = sadd.s32 %s17, 1
      %s25 = ssub.s32 %s17, %s24
      %p26 = scmp.eq.s32.totalorder %s25, 0
      %s28 = sadd.s32 %s27, 1
      %s29 = scalar_select %p26, %s27, %s28
      %p32 = pneg %p26
      %p33 = scmp.eq.s32.totalorder %s17, 1
      %p34 = por %p32, %p33
      %p35 = scmp.ne.s32.totalorder %s27, %s30
      %p36 = scmp.eq.s32.totalorder %s17, 0
      %p37 = por %p35, %p36
      %p38 = scmp.ne.s32.totalorder %s27, %s30
      %p39 = scmp.eq.s32.totalorder %s22, 1
      %p40 = por %p38, %p39
      %p41 = scmp.ne.s32.totalorder %s30, %s31
      %p42 = scmp.eq.s32.totalorder %s22, 0
      %p43 = por %p41, %p42
      %p44 = scmp.ne.s32.totalorder %s30, %s31
      %p45 = scmp.eq.s32.totalorder %s23, 1
      %p46 = por %p44, %p45
      %p48 = scmp.ne.s32.totalorder %s31, %s47
      %p49 = scmp.eq.s32.totalorder %s23, 0
      %p50 = por %p48, %p49
      %s52 = sadd.s32 %s51, 1
      %p55 = scmp.eq.s32.totalorder %s17, 1
      %p56 = scmp.ne.s32.totalorder %s51, %s53
      %p57 = scmp.eq.s32.totalorder %s17, 0
      %p58 = por %p56, %p57
      %p59 = scmp.ne.s32.totalorder %s51, %s53
      %p60 = scmp.eq.s32.totalorder %s22, 1
      %p61 = por %p59, %p60
      %p62 = scmp.ne.s32.totalorder %s53, %s54
      %p63 = scmp.eq.s32.totalorder %s22, 0
      %p64 = por %p62, %p63
      %p65 = scmp.ne.s32.totalorder %s53, %s54
      %p66 = scmp.eq.s32.totalorder %s23, 1
      %p67 = por %p65, %p66
      %p69 = scmp.ne.s32.totalorder %s54, %s68
      %p70 = scmp.eq.s32.totalorder %s23, 0
      %p71 = por %p69, %p70
      %s73 = sadd.s32 %s72, 1
      %p76 = scmp.eq.s32.totalorder %s17, 1
      %p77 = scmp.ne.s32.totalorder %s72, %s74
      %p78 = scmp.eq.s32.totalorder %s17, 0
      %p79 = por %p77, %p78
      %p80 = scmp.ne.s32.totalorder %s72, %s74
      %p81 = scmp.eq.s32.totalorder %s22, 1
      %p82 = por %p80, %p81
      %p83 = scmp.ne.s32.totalorder %s74, %s75
      %p84 = scmp.eq.s32.totalorder %s22, 0
      %p85 = por %p83, %p84
      %p86 = scmp.ne.s32.totalorder %s74, %s75
      %p87 = scmp.eq.s32.totalorder %s23, 1
      %p88 = por %p86, %p87
      %p90 = scmp.ne.s32.totalorder %s75, %s89
      %p91 = scmp.eq.s32.totalorder %s23, 0
      %p92 = por %p90, %p91
      %s94 = sadd.s32 %s93, 1
      %p97 = scmp.eq.s32.totalorder %s17, 1
      %p98 = scmp.ne.s32.totalorder %s93, %s95
      %p99 = scmp.eq.s32.totalorder %s17, 0
      %p100 = por %p98, %p99
      %p101 = scmp.ne.s32.totalorder %s93, %s95
      %p102 = scmp.eq.s32.totalorder %s22, 1
      %p103 = por %p101, %p102
      %p104 = scmp.ne.s32.totalorder %s95, %s96
      %p105 = scmp.eq.s32.totalorder %s22, 0
      %p106 = por %p104, %p105
      %p107 = scmp.ne.s32.totalorder %s95, %s96
      %p108 = scmp.eq.s32.totalorder %s23, 1
      %p109 = por %p107, %p108
      %p111 = scmp.ne.s32.totalorder %s96, %s110
      %p112 = scmp.eq.s32.totalorder %s23, 0
      %p113 = por %p111, %p112
      %s115 = sadd.s32 %s114, 1
      %p118 = scmp.eq.s32.totalorder %s17, 1
      %p119 = scmp.ne.s32.totalorder %s114, %s116
      %p120 = scmp.eq.s32.totalorder %s17, 0
      %p121 = por %p119, %p120
      %p122 = scmp.ne.s32.totalorder %s114, %s116
      %p123 = scmp.eq.s32.totalorder %s22, 1
      %p124 = por %p122, %p123
      %p125 = scmp.ne.s32.totalorder %s116, %s117
      %p126 = scmp.eq.s32.totalorder %s22, 0
      %p127 = por %p125, %p126
      %p128 = scmp.ne.s32.totalorder %s116, %s117
      %p129 = scmp.eq.s32.totalorder %s23, 1
      %p130 = por %p128, %p129
      %p132 = scmp.ne.s32.totalorder %s117, %s131
      %p133 = scmp.eq.s32.totalorder %s23, 0
      %p134 = por %p132, %p133
      %s135 = ssub.s32 %s17, %s24
      %p136 = scmp.eq.s32.totalorder %s135, 0
      %s138 = sadd.s32 %s137, 1
      %s139 = scalar_select %p136, %s137, %s138
      %p142 = pneg %p136
      %p143 = scmp.eq.s32.totalorder %s17, 1
      %p144 = por %p142, %p143
      %p145 = scmp.ne.s32.totalorder %s137, %s140
      %p146 = scmp.eq.s32.totalorder %s17, 0
      %p147 = por %p145, %p146
      %p148 = scmp.ne.s32.totalorder %s137, %s140
      %p149 = scmp.eq.s32.totalorder %s22, 1
      %p150 = por %p148, %p149
      %p151 = scmp.ne.s32.totalorder %s140, %s141
      %p152 = scmp.eq.s32.totalorder %s22, 0
      %p153 = por %p151, %p152
      %p154 = scmp.ne.s32.totalorder %s140, %s141
      %p155 = scmp.eq.s32.totalorder %s23, 1
      %p156 = por %p154, %p155
      %p158 = scmp.ne.s32.totalorder %s141, %s157
      %p159 = scmp.eq.s32.totalorder %s23, 0
      %p160 = por %p158, %p159
      %p161 = scmp.le.s32.totalorder 1, %s17
      %p162 = scmp.lt.s32.totalorder %s17, 3
      %p163 = pnand %p161, %p162
      %p164 = pneg %p163
      // Predicated region
      $region9: #{tpu_custom_call.1} parent=5 // pred_check
        _
      $region10: #{tpu_custom_call.1} parent=5 // pred_check_branch
        %166 = sbr.rel (%p163) target = $region12
      $region11: #{tpu_custom_call.1} parent=5 // pred_region
        %s167 = ssub.s32 %s17, 1
        // Predicated region
        $region13: #{tpu_custom_call.1} parent=11 // pred_check
          %p168 = pneg %p64
        $region14: #{tpu_custom_call.1} parent=11 // pred_check_branch
          %170 = sbr.rel (%p168) target = $region16
        $region15: #{tpu_custom_call.1} parent=11 // pred_region
          _
        $region16: #{tpu_custom_call.1} parent=11 // pred_fallthru
          _
        // Predicated region
        $region17: #{tpu_custom_call.1} parent=11 // pred_check
          %p171 = pneg %p85
        $region18: #{tpu_custom_call.1} parent=11 // pred_check_branch
          %173 = sbr.rel (%p171) target = $region20
        $region19: #{tpu_custom_call.1} parent=11 // pred_region
          _
        $region20: #{tpu_custom_call.1} parent=11 // pred_fallthru
          _
        // Predicated region
        $region21: #{tpu_custom_call.1} parent=11 // pred_check
          %p174 = pneg %p106
        $region22: #{tpu_custom_call.1} parent=11 // pred_check_branch
          %176 = sbr.rel (%p174) target = $region24
        $region23: #{tpu_custom_call.1} parent=11 // pred_region
          _
        $region24: #{tpu_custom_call.1} parent=11 // pred_fallthru
          _
        // Predicated region
        $region25: #{tpu_custom_call.1} parent=11 // pred_check
          %p177 = pneg %p127
        $region26: #{tpu_custom_call.1} parent=11 // pred_check_branch
          %179 = sbr.rel (%p177) target = $region28
        $region27: #{tpu_custom_call.1} parent=11 // pred_region
          _
        $region28: #{tpu_custom_call.1} parent=11 // pred_fallthru
          _
      $region12: #{tpu_custom_call.1} parent=5 // pred_fallthru
        _
      %p180 = scmp.lt.s32.totalorder %s17, 2
      // Predicated region
      $region29: #{tpu_custom_call.1} parent=5 // pred_check
        %p181 = pneg %p180
      $region30: #{tpu_custom_call.1} parent=5 // pred_check_branch
        %183 = sbr.rel (%p181) target = $region32
      $region31: #{tpu_custom_call.1} parent=5 // pred_region
        // Predicated region
        $region33: #{tpu_custom_call.1} parent=31 // pred_check
          %p184 = pneg %p37
        $region34: #{tpu_custom_call.1} parent=31 // pred_check_branch
          %186 = sbr.rel (%p184) target = $region36
        $region35: #{tpu_custom_call.1} parent=31 // pred_region
          %s187 = sand.u32 %s27, 1
          %s188 = scalar_lea.sflag [#allocation8], %s187
          %s189 = sand.u32 %s27, 1
          %s190 = smul.addr %s189, 32
          %s191 = scalar_lea.vmem [#allocation7], %s190
          %s193 = ssub.s32 512, 512
          %194 = vsyncadd %s188, %s193
          %s195 = smul.addr %s17, 8
          %s196 = smul.addr %s195, 64
          %s197 = scalar_lea.hbm %s0, %s196
          %s198 = sshll.u32 %s191, 4
          %s199 = int_to_ptr.vmem [resolvable:$true] %s198
          %204 = dma.hbm_to_vmem [thread:$0]  %s197, 512, %s199, %s188, 256, 256, 16
        $region36: #{tpu_custom_call.1} parent=31 // pred_fallthru
          _
      $region32: #{tpu_custom_call.1} parent=5 // pred_fallthru
        _
      %p205 = scmp.le.s32.totalorder 1, %s17
      %p206 = scmp.lt.s32.totalorder %s17, 3
      %p207 = pnand %p205, %p206
      %p208 = pneg %p207
      // Predicated region
      $region37: #{tpu_custom_call.1} parent=5 // pred_check
        _
      $region38: #{tpu_custom_call.1} parent=5 // pred_check_branch
        %210 = sbr.rel (%p207) target = $region40
      $region39: #{tpu_custom_call.1} parent=5 // pred_region
        %s211 = ssub.s32 %s17, 1
        %s212 = sand.u32 %s30, 1
        %s213 = scalar_lea.sflag [#allocation8], %s212
        %s214 = sand.u32 %s30, 1
        %s215 = smul.addr %s214, 32
        %s216 = scalar_lea.vmem [#allocation7], %s215
        // Predicated region
        $region41: #{tpu_custom_call.1} parent=39 // pred_check
          %p217 = pneg %p43
        $region42: #{tpu_custom_call.1} parent=39 // pred_check_branch
          %219 = sbr.rel (%p217) target = $region44
        $region43: #{tpu_custom_call.1} parent=39 // pred_region
          %220 = dma.done %s213, 512
        $region44: #{tpu_custom_call.1} parent=39 // pred_fallthru
          _
        %s221 = sand.u32 %s30, 1
        %s222 = scalar_lea.sflag [#allocation8], %s221
        %s223 = sand.u32 %s30, 1
        %s224 = smul.addr %s223, 32
        %s225 = scalar_lea.vmem [#allocation7], %s224
        %p226 = pneg %p43
        %p227 = pneg %p40
        %p228 = pneg %p64
        %p229 = pneg %p61
        %p230 = pneg %p85
        %p231 = pneg %p82
        %p232 = pneg %p106
        %p233 = pneg %p103
        %p234 = pneg %p127
        %p235 = pneg %p124
        %p236 = pneg %p153
        %p237 = pneg %p150
        %s238 = sand.u32 %s140, 1
        %s239 = scalar_lea.sflag [#allocation9], %s238
        %s240 = sand.u32 %s140, 1
        %s241 = smul.addr %s240, 16
        %s242 = scalar_lea.vmem [#allocation10], %s241
        %v244 = vld [vmem:[%s216] sm:$0xff]
        %v245 = vld [vmem:[%s216 + $0x8] sm:$0xff]
        %v246 = vld [vmem:[%s216 + $0x10] sm:$0xff]
        %v247 = vld [vmem:[%s216 + $0x18] sm:$0xff]
        %v252 = vunpack.c.l.b16 %v244
        %v253 = vunpack.c.h.b16 %v244
        %v254 = vunpack.c.l.b16 %v245
        %v255 = vunpack.c.l.b16 %v246
        %v256 = vunpack.c.h.b16 %v246
        %v257 = vunpack.c.l.b16 %v247
        %v258 = vpack.c.b16 %v255, %v252
        %v259 = vpack.c.b16 %v256, %v253
        %v260 = vpack.c.b16 %v257, %v254
        %264 = vst [vmem:[#allocation2] sm:$0xff] %v258
        %265 = vst [vmem:[#allocation2 + $0x8] sm:$0xff] %v259
        %266 = vst [vmem:[#allocation2 + $0x10] sm:$0xff] %v260
        %v267 = vunpack.c.h.b16 %v245
        %v268 = vunpack.c.h.b16 %v247
        %v269 = vpack.c.b16 %v268, %v267
        %270 = vrot.lane.b32.xlu0 %v258, 127
        %v271 = vpop.permute.xlu0 %270
        %272 = vrot.lane.b32.xlu0 %v259, 127
        %v273 = vpop.permute.xlu0 %272
        %274 = vrot.lane.b32.xlu0 %v260, 127
        %v275 = vpop.permute.xlu0 %274
        %276 = vrot.lane.b32.xlu0 %v269, 127
        %v277 = vpop.permute.xlu0 %276
        %vm278 = vcmask 1039360
        %v279 = vsel %vm278, %v271, %v273
        %v280 = vsel %vm278, %v273, %v275
        %v281 = vsel %vm278, %v275, %v277
        %285 = vst [vmem:[#allocation2 + $0x18] sm:$0xff] %v279
        %286 = vst [vmem:[#allocation2 + $0x20] sm:$0xff] %v280
        %287 = vst [vmem:[#allocation2 + $0x28] sm:$0xff] %v281
        %288 = vrot.lane.b32.xlu0 %v258, 126
        %v289 = vpop.permute.xlu0 %288
        %290 = vrot.lane.b32.xlu0 %v259, 126
        %v291 = vpop.permute.xlu0 %290
        %292 = vrot.lane.b32.xlu0 %v260, 126
        %v293 = vpop.permute.xlu0 %292
        %294 = vrot.lane.b32.xlu0 %v269, 126
        %v295 = vpop.permute.xlu0 %294
        %vm296 = vcmask 1031168
        %v297 = vsel %vm296, %v289, %v291
        %v298 = vsel %vm296, %v291, %v293
        %v299 = vsel %vm296, %v293, %v295
        %303 = vst [vmem:[#allocation2 + $0x30] sm:$0xff] %v297
        %304 = vst [vmem:[#allocation2 + $0x38] sm:$0xff] %v298
        %305 = vst [vmem:[#allocation2 + $0x40] sm:$0xff] %v299
        %306 = vrot.lane.b32.xlu0 %v258, 110
        %v307 = vpop.permute.xlu0 %306
        %308 = vrot.lane.b32.xlu0 %v259, 110
        %v309 = vpop.permute.xlu0 %308
        %310 = vrot.lane.b32.xlu0 %v260, 110
        %v311 = vpop.permute.xlu0 %310
        %312 = vrot.lane.b32.xlu0 %v269, 110
        %v313 = vpop.permute.xlu0 %312
        %vm314 = vcmask 900096
        %v315 = vsel %vm314, %v307, %v309
        %v316 = vsel %vm314, %v309, %v311
        %v317 = vsel %vm314, %v311, %v313
        %321 = vst [vmem:[#allocation2 + $0x48] sm:$0xff] %v315
        %322 = vst [vmem:[#allocation2 + $0x50] sm:$0xff] %v316
        %323 = vst [vmem:[#allocation2 + $0x58] sm:$0xff] %v317
        %324 = vrot.lane.b32.xlu0 %v258, 109
        %v325 = vpop.permute.xlu0 %324
        %326 = vrot.lane.b32.xlu0 %v259, 109
        %v327 = vpop.permute.xlu0 %326
        %328 = vrot.lane.b32.xlu0 %v260, 109
        %v329 = vpop.permute.xlu0 %328
        %330 = vrot.lane.b32.xlu0 %v269, 109
        %v331 = vpop.permute.xlu0 %330
        %vm332 = vcmask 891904
        %v333 = vsel %vm332, %v325, %v327
        %v334 = vsel %vm332, %v327, %v329
        %v335 = vsel %vm332, %v329, %v331
        %339 = vst [vmem:[#allocation2 + $0x60] sm:$0xff] %v333
        %340 = vst [vmem:[#allocation2 + $0x68] sm:$0xff] %v334
        %341 = vst [vmem:[#allocation2 + $0x70] sm:$0xff] %v335
        %342 = vrot.lane.b32.xlu0 %v258, 108
        %v343 = vpop.permute.xlu0 %342
        %344 = vrot.lane.b32.xlu0 %v259, 108
        %v345 = vpop.permute.xlu0 %344
        %346 = vrot.lane.b32.xlu0 %v260, 108
        %v347 = vpop.permute.xlu0 %346
        %348 = vrot.lane.b32.xlu0 %v269, 108
        %v349 = vpop.permute.xlu0 %348
        %vm350 = vcmask 883712
        %v351 = vsel %vm350, %v343, %v345
        %v352 = vsel %vm350, %v345, %v347
        %v353 = vsel %vm350, %v347, %v349
        %357 = vst [vmem:[#allocation2 + $0x78] sm:$0xff] %v351
        %358 = vst [vmem:[#allocation2 + $0x80] sm:$0xff] %v352
        %359 = vst [vmem:[#allocation2 + $0x88] sm:$0xff] %v353
        %360 = vrot.lane.b32.xlu0 %v258, 92
        %v361 = vpop.permute.xlu0 %360
        %362 = vrot.lane.b32.xlu0 %v259, 92
        %v363 = vpop.permute.xlu0 %362
        %364 = vrot.lane.b32.xlu0 %v260, 92
        %v365 = vpop.permute.xlu0 %364
        %366 = vrot.lane.b32.xlu0 %v269, 92
        %v367 = vpop.permute.xlu0 %366
        %vm368 = vcmask 752640
        %v369 = vsel %vm368, %v361, %v363
        %v370 = vsel %vm368, %v363, %v365
        %v371 = vsel %vm368, %v365, %v367
        %375 = vst [vmem:[#allocation2 + $0x90] sm:$0xff] %v369
        %376 = vst [vmem:[#allocation2 + $0x98] sm:$0xff] %v370
        %377 = vst [vmem:[#allocation2 + $0xa0] sm:$0xff] %v371
        %378 = vrot.lane.b32.xlu0 %v258, 91
        %v379 = vpop.permute.xlu0 %378
        %380 = vrot.lane.b32.xlu0 %v259, 91
        %v381 = vpop.permute.xlu0 %380
        %382 = vrot.lane.b32.xlu0 %v260, 91
        %v383 = vpop.permute.xlu0 %382
        %384 = vrot.lane.b32.xlu0 %v269, 91
        %v385 = vpop.permute.xlu0 %384
        %vm386 = vcmask 744448
        %v387 = vsel %vm386, %v379, %v381
        %v388 = vsel %vm386, %v381, %v383
        %v389 = vsel %vm386, %v383, %v385
        %393 = vst [vmem:[#allocation2 + $0xa8] sm:$0xff] %v387
        %394 = vst [vmem:[#allocation2 + $0xb0] sm:$0xff] %v388
        %395 = vst [vmem:[#allocation2 + $0xb8] sm:$0xff] %v389
        %396 = vrot.lane.b32.xlu0 %v258, 90
        %v397 = vpop.permute.xlu0 %396
        %398 = vrot.lane.b32.xlu0 %v259, 90
        %v399 = vpop.permute.xlu0 %398
        %400 = vrot.lane.b32.xlu0 %v260, 90
        %v401 = vpop.permute.xlu0 %400
        %402 = vrot.lane.b32.xlu0 %v269, 90
        %v403 = vpop.permute.xlu0 %402
        %vm404 = vcmask 736256
        %v405 = vsel %vm404, %v397, %v399
        %v406 = vsel %vm404, %v399, %v401
        %v407 = vsel %vm404, %v401, %v403
        %411 = vst [vmem:[#allocation2 + $0xc0] sm:$0xff] %v405
        %412 = vst [vmem:[#allocation2 + $0xc8] sm:$0xff] %v406
        %413 = vst [vmem:[#allocation2 + $0xd0] sm:$0xff] %v407
        %v414 = vld [vmem:[%s1] sm:$0xff]
        %v415 = vld [vmem:[#allocation2] sm:$0xff]
        %v416 = vld [vmem:[#allocation2 + $0x8] sm:$0xff]
        %v417 = vld [vmem:[#allocation2 + $0x10] sm:$0xff]
        %v418 = vld [vmem:[#allocation2 + $0x18] sm:$0xff]
        %v419 = vld [vmem:[#allocation2 + $0x20] sm:$0xff]
        %v420 = vld [vmem:[#allocation2 + $0x28] sm:$0xff]
        %v421 = vld [vmem:[#allocation2 + $0x30] sm:$0xff]
        %v422 = vld [vmem:[#allocation2 + $0x38] sm:$0xff]
        %v423 = vld [vmem:[#allocation2 + $0x40] sm:$0xff]
        %v424 = vld [vmem:[#allocation2 + $0x48] sm:$0xff]
        %v425 = vld [vmem:[#allocation2 + $0x50] sm:$0xff]
        %v426 = vld [vmem:[#allocation2 + $0x58] sm:$0xff]
        %v427 = vld [vmem:[#allocation2 + $0x60] sm:$0xff]
        %v428 = vld [vmem:[#allocation2 + $0x68] sm:$0xff]
        %v429 = vld [vmem:[#allocation2 + $0x70] sm:$0xff]
        %v430 = vld [vmem:[#allocation2 + $0x78] sm:$0xff]
        %v431 = vld [vmem:[#allocation2 + $0x80] sm:$0xff]
        %v432 = vld [vmem:[#allocation2 + $0x88] sm:$0xff]
        %v433 = vld [vmem:[#allocation2 + $0x90] sm:$0xff]
        %v434 = vld [vmem:[#allocation2 + $0x98] sm:$0xff]
        %v435 = vld [vmem:[#allocation2 + $0xa0] sm:$0xff]
        %v436 = vld [vmem:[#allocation2 + $0xa8] sm:$0xff]
        %v437 = vld [vmem:[#allocation2 + $0xb0] sm:$0xff]
        %v438 = vld [vmem:[#allocation2 + $0xb8] sm:$0xff]
        %v439 = vld [vmem:[#allocation2 + $0xc0] sm:$0xff]
        %v440 = vld [vmem:[#allocation2 + $0xc8] sm:$0xff]
        %v441 = vld [vmem:[#allocation2 + $0xd0] sm:$0xff]
        %v442 = vld [vmem:[%s2] sm:$0xff]
        %444 = vset.pattern.permute.xlu0 0
        %445 = vperm.xlu0 %444, %v442
        %v446 = vpop.permute.xlu0 %445
        %v449 = vunpack.c.l.b16 %v414
        %v450 = vunpack.c.h.b16 %v414
        %v451 = vpack.c.b16 %v449, %v449
        %v452 = vpack.c.b16 %v450, %v450
        %vm454 = vcmask 130048
        %v456 = vsel %vm454, %v452, 0
        %458 = vmatprep.subr.bf16.mxu0 %v416
        %459 = vmatpush1.bf16.msra.mxu0 %v415
        %460 = vmatprep.subr.bf16.mxu0 %v419
        %461 = vmatpush1.bf16.msra.mxu0 %v418
        %462 = vmatprep.subr.bf16.mxu0 %v422
        %463 = vmatpush1.bf16.msra.mxu0 %v421
        %464 = vmatprep.subr.bf16.mxu0 %v425
        %465 = vmatpush1.bf16.msra.mxu0 %v424
        %466 = vmatprep.subr.bf16.mxu0 %v428
        %467 = vmatpush1.bf16.msra.mxu0 %v427
        %468 = vmatprep.subr.bf16.mxu0 %v431
        %469 = vmatpush1.bf16.msra.mxu0 %v430
        %470 = vmatprep.subr.bf16.mxu0 %v434
        %471 = vmatpush1.bf16.msra.mxu0 %v433
        %472 = vmatprep.subr.bf16.mxu0 %v437
        %473 = vmatpush1.bf16.msra.mxu0 %v436
        %474 = vmatprep.subr.bf16.mxu0 %v440
        %475 = vmatpush1.bf16.msra.mxu0 %v439
        %476 = vmatprep.subr.bf16.mxu0 0
        %477 = vmatpush1.bf16.msra.mxu0 0
        %478 = vmatprep.subr.bf16.mxu0 0
        %479 = vmatpush1.bf16.msra.mxu0 0
        %480 = vmatprep.subr.bf16.mxu0 0
        %481 = vmatpush1.bf16.msra.mxu0 0
        %482 = vmatprep.subr.bf16.mxu0 0
        %483 = vmatpush1.bf16.msra.mxu0 0
        %484 = vmatprep.subr.bf16.mxu0 0
        %485 = vmatpush1.bf16.msra.mxu0 0
        %486 = vmatprep.subr.bf16.mxu0 0
        %487 = vmatpush1.bf16.msra.mxu0 0
        %488 = vmatprep.subr.bf16.mxu0 0
        %489 = vmatpush1.bf16.msra.mxu0 0
        %490 = vmatprep.mubr.bf16.mxu0 %v456
        %491 = vmatmul.mubr.bf16.gmra.mrb[0].mxu0 %v451
        %v492 = vpop.f32.mrb[0].mxu0
        %v493 = vadd.f32 %v446, %v492
        %v494 = vpop.f32.mrb[0].mxu0
        %v495 = vadd.f32 %v446, %v494
        %v496 = vpop.f32.mrb[0].mxu0
        %v497 = vpop.f32.mrb[0].mxu0
        %498 = vdwg.mxu0
        %499 = vmatprep.subr.bf16.mxu0 0
        %500 = vmatpush1.bf16.msra.mxu0 %v417
        %501 = vmatprep.subr.bf16.mxu0 0
        %502 = vmatpush1.bf16.msra.mxu0 %v420
        %503 = vmatprep.subr.bf16.mxu0 0
        %504 = vmatpush1.bf16.msra.mxu0 %v423
        %505 = vmatprep.subr.bf16.mxu0 0
        %506 = vmatpush1.bf16.msra.mxu0 %v426
        %507 = vmatprep.subr.bf16.mxu0 0
        %508 = vmatpush1.bf16.msra.mxu0 %v429
        %509 = vmatprep.subr.bf16.mxu0 0
        %510 = vmatpush1.bf16.msra.mxu0 %v432
        %511 = vmatprep.subr.bf16.mxu0 0
        %512 = vmatpush1.bf16.msra.mxu0 %v435
        %513 = vmatprep.subr.bf16.mxu0 0
        %514 = vmatpush1.bf16.msra.mxu0 %v438
        %515 = vmatprep.subr.bf16.mxu0 0
        %516 = vmatpush1.bf16.msra.mxu0 %v441
        %517 = vmatprep.subr.bf16.mxu0 0
        %518 = vmatpush1.bf16.msra.mxu0 0
        %519 = vmatprep.subr.bf16.mxu0 0
        %520 = vmatpush1.bf16.msra.mxu0 0
        %521 = vmatprep.subr.bf16.mxu0 0
        %522 = vmatpush1.bf16.msra.mxu0 0
        %523 = vmatprep.subr.bf16.mxu0 0
        %524 = vmatpush1.bf16.msra.mxu0 0
        %525 = vmatprep.subr.bf16.mxu0 0
        %526 = vmatpush1.bf16.msra.mxu0 0
        %527 = vmatprep.subr.bf16.mxu0 0
        %528 = vmatpush1.bf16.msra.mxu0 0
        %529 = vmatprep.subr.bf16.mxu0 0
        %530 = vmatpush1.bf16.msra.mxu0 0
        %531 = vmatprep.mubr.bf16.mxu0 %v456
        %532 = vmatmul.mubr.bf16.gmra.mrb[0].mxu0 %v451
        %v533 = vpop.f32.mrb[0].mxu0
        %v534 = vadd.f32 %v446, %v533
        %v535 = vpop.f32.mrb[0].mxu0
        %v536 = vpop.f32.mrb[0].mxu0
        %v537 = vpop.f32.mrb[0].mxu0
        %538 = vdwg.mxu0
        %v539 = vmax.f32 %v493, 0.0
        %v540 = vmax.f32 %v495, 0.0
        %v541 = vmax.f32 %v534, 0.0
        %543 = vrot.lane.b32.xlu0 %v539, 127
        %v544 = vpop.permute.xlu0 %543
        %v546 = vmax.f32 %v539, %v544
        %548 = vrot.lane.b32.xlu0 %v546, 110
        %v549 = vpop.permute.xlu0 %548
        %v551 = vmax.f32 %v546, %v549
        %552 = vst.msk [vmem:[#allocation3] sm:$0xff] %vm454, %v551
        %554 = vrot.lane.b32.xlu0 %v551, 92
        %v555 = vpop.permute.xlu0 %554
        %557 = vst.msk [vmem:[#allocation3 + $0x8] sm:$0xff] %vm454, %v555
        %558 = vrot.lane.b32.xlu0 %v551, 56
        %v559 = vpop.permute.xlu0 %558
        %561 = vst.msk [vmem:[#allocation3 + $0x10] sm:$0xff] %vm454, %v559
        %563 = vrot.lane.b32.xlu0 %v540, 127
        %v564 = vpop.permute.xlu0 %563
        %vm565 = vcmask 1039360
        %v566 = vsel %vm565, %v544, %v564
        %v569 = vmax.f32 %v539, %v566
        %v570 = vmax.f32 %v540, %v564
        %573 = vrot.lane.b32.xlu0 %v569, 110
        %v574 = vpop.permute.xlu0 %573
        %575 = vrot.lane.b32.xlu0 %v570, 110
        %v576 = vpop.permute.xlu0 %575
        %vm577 = vcmask 900096
        %v578 = vsel %vm577, %v574, %v576
        %v580 = vmax.f32 %v546, %v578
        %582 = vrot.lane.b32.xlu0 %v580, 20
        %v583 = vpop.permute.xlu0 %582
        %585 = vst.msk [vmem:[#allocation3 + $0x18] sm:$0xff] %vm454, %v583
        %v587 = vmax.f32 %v570, %v576
        %589 = vrot.lane.b32.xlu0 %v587, 112
        %v590 = vpop.permute.xlu0 %589
        %592 = vst.msk [vmem:[#allocation3 + $0x20] sm:$0xff] %vm454, %v590
        %593 = vrot.lane.b32.xlu0 %v587, 76
        %v594 = vpop.permute.xlu0 %593
        %596 = vst.msk [vmem:[#allocation3 + $0x28] sm:$0xff] %vm454, %v594
        %597 = vrot.lane.b32.xlu0 %v587, 40
        %v598 = vpop.permute.xlu0 %597
        %600 = vst.msk [vmem:[#allocation3 + $0x30] sm:$0xff] %vm454, %v598
        %602 = vrot.lane.b32.xlu0 %v541, 127
        %v603 = vpop.permute.xlu0 %602
        %v604 = vsel %vm565, %v564, %v603
        %v607 = vmax.f32 %v540, %v604
        %v608 = vmax.f32 %v541, %v603
        %610 = vrot.lane.b32.xlu0 %v608, 110
        %v611 = vpop.permute.xlu0 %610
        %v613 = vmax.f32 %v607, %v611
        %v614 = vmax.f32 %v608, %v611
        %617 = vrot.lane.b32.xlu0 %v613, 4
        %v618 = vpop.permute.xlu0 %617
        %619 = vrot.lane.b32.xlu0 %v614, 4
        %v620 = vpop.permute.xlu0 %619
        %vm621 = vcmask 31744
        %v622 = vsel %vm621, %v618, %v620
        %624 = vst.msk [vmem:[#allocation3 + $0x38] sm:$0xff] %vm454, %v622
        %v625 = vld [vmem:[#allocation3] sm:$0xff]
        %v626 = vld [vmem:[#allocation3 + $0x8] sm:$0xff]
        %v627 = vld [vmem:[#allocation3 + $0x10] sm:$0xff]
        %v628 = vld [vmem:[#allocation3 + $0x18] sm:$0xff]
        %v629 = vld [vmem:[#allocation3 + $0x20] sm:$0xff]
        %v630 = vld [vmem:[#allocation3 + $0x28] sm:$0xff]
        %v631 = vld [vmem:[#allocation3 + $0x30] sm:$0xff]
        %v632 = vld [vmem:[#allocation3 + $0x38] sm:$0xff]
        %v633 = vlaneseq
        %v634 = vshrl.u32 %v633, 7
        %v635 = vadd.s32 %v634, 8
        %v636 = vlaneseq
        %v637 = vand.u32 %v636, 127
        %v638 = vmul.u32 %v637, 2
        %vm639 = vcmp.eq.s32.totalorder %v634, %v638
        %vm640 = vcmp.eq.s32.totalorder %v635, %v638
        %v641 = vsel %vm639, 1, 0
        %v642 = vsel %vm640, 1, 0
        %v643 = vcvt.s32.f32 %v641
        %v644 = vcvt.s32.f32 %v642
        %v646 = vsel %vm454, %v625, 0
        %v649 = vsel %vm454, %v626, 0
        %v652 = vsel %vm454, %v627, 0
        %v655 = vsel %vm454, %v628, 0
        %v658 = vsel %vm454, %v629, 0
        %v661 = vsel %vm454, %v630, 0
        %v664 = vsel %vm454, %v631, 0
        %v667 = vsel %vm454, %v632, 0
        %669 = vmatprep.subr.mxu0 0.0
        %670 = vmatpush1.msra.mxu0 %v643
        %671 = vmatprep.subr.mxu0 0.0
        %672 = vmatpush1.msra.mxu0 %v644
        %673 = vmatprep.subr.mxu0 0.0
        %674 = vmatpush1.msra.mxu0 0.0
        %675 = vmatprep.subr.mxu0 0.0
        %676 = vmatpush1.msra.mxu0 0.0
        %677 = vmatprep.subr.mxu0 0.0
        %678 = vmatpush1.msra.mxu0 0.0
        %679 = vmatprep.subr.mxu0 0.0
        %680 = vmatpush1.msra.mxu0 0.0
        %681 = vmatprep.subr.mxu0 0.0
        %682 = vmatpush1.msra.mxu0 0.0
        %683 = vmatprep.subr.mxu0 0.0
        %684 = vmatpush1.msra.mxu0 0.0
        %685 = vmatprep.subr.mxu0 0.0
        %686 = vmatpush1.msra.mxu0 0.0
        %687 = vmatprep.subr.mxu0 0.0
        %688 = vmatpush1.msra.mxu0 0.0
        %689 = vmatprep.subr.mxu0 0.0
        %690 = vmatpush1.msra.mxu0 0.0
        %691 = vmatprep.subr.mxu0 0.0
        %692 = vmatpush1.msra.mxu0 0.0
        %693 = vmatprep.subr.mxu0 0.0
        %694 = vmatpush1.msra.mxu0 0.0
        %695 = vmatprep.subr.mxu0 0.0
        %696 = vmatpush1.msra.mxu0 0.0
        %697 = vmatprep.subr.mxu0 0.0
        %698 = vmatpush1.msra.mxu0 0.0
        %699 = vmatprep.subr.mxu0 0.0
        %700 = vmatpush1.msra.mxu0 0.0
        %701 = vmatprep.subr.mxu0 0.0
        %702 = vmatpush1.msra.mxu0 0.0
        %703 = vmatprep.subr.mxu0 0.0
        %704 = vmatpush1.msra.mxu0 0.0
        %705 = vmatprep.subr.mxu0 0.0
        %706 = vmatpush1.msra.mxu0 0.0
        %707 = vmatprep.subr.mxu0 0.0
        %708 = vmatpush1.msra.mxu0 0.0
        %709 = vmatprep.subr.mxu0 0.0
        %710 = vmatpush1.msra.mxu0 0.0
        %711 = vmatprep.subr.mxu0 0.0
        %712 = vmatpush1.msra.mxu0 0.0
        %713 = vmatprep.subr.mxu0 0.0
        %714 = vmatpush1.msra.mxu0 0.0
        %715 = vmatprep.subr.mxu0 0.0
        %716 = vmatpush1.msra.mxu0 0.0
        %717 = vmatprep.subr.mxu0 0.0
        %718 = vmatpush1.msra.mxu0 0.0
        %719 = vmatprep.subr.mxu0 0.0
        %720 = vmatpush1.msra.mxu0 0.0
        %721 = vmatprep.subr.mxu0 0.0
        %722 = vmatpush1.msra.mxu0 0.0
        %723 = vmatprep.subr.mxu0 0.0
        %724 = vmatpush1.msra.mxu0 0.0
        %725 = vmatprep.subr.mxu0 0.0
        %726 = vmatpush1.msra.mxu0 0.0
        %727 = vmatprep.subr.mxu0 0.0
        %728 = vmatpush1.msra.mxu0 0.0
        %729 = vmatprep.subr.mxu0 0.0
        %730 = vmatpush1.msra.mxu0 0.0
        %731 = vmatprep.subr.mxu0 0.0
        %732 = vmatpush1.msra.mxu0 0.0
        %733 = vmatprep.mubr.f32.mxu0 0.0
        %734 = vmatmul.mubr.f32.gmra.mrb[0].mxu0 %v646
        %v735 = vpop.f32.mrb[0].mxu0
        %v736 = vadd.f32 0.0, %v735
        %v737 = vpop.f32.mrb[0].mxu0
        %738 = vmatprep.mubr.f32.mxu0 0.0
        %739 = vmatmul.mubr.f32.gmra.mrb[0].mxu0 %v649
        %v740 = vpop.f32.mrb[0].mxu0
        %v741 = vadd.f32 0.0, %v740
        %v742 = vpop.f32.mrb[0].mxu0
        %743 = vmatprep.mubr.f32.mxu0 0.0
        %744 = vmatmul.mubr.f32.gmra.mrb[0].mxu0 %v652
        %v745 = vpop.f32.mrb[0].mxu0
        %v746 = vadd.f32 0.0, %v745
        %v747 = vpop.f32.mrb[0].mxu0
        %748 = vmatprep.mubr.f32.mxu0 0.0
        %749 = vmatmul.mubr.f32.gmra.mrb[0].mxu0 %v655
        %v750 = vpop.f32.mrb[0].mxu0
        %v751 = vadd.f32 0.0, %v750
        %v752 = vpop.f32.mrb[0].mxu0
        %753 = vmatprep.mubr.f32.mxu0 0.0
        %754 = vmatmul.mubr.f32.gmra.mrb[0].mxu0 %v658
        %v755 = vpop.f32.mrb[0].mxu0
        %v756 = vadd.f32 0.0, %v755
        %v757 = vpop.f32.mrb[0].mxu0
        %758 = vmatprep.mubr.f32.mxu0 0.0
        %759 = vmatmul.mubr.f32.gmra.mrb[0].mxu0 %v661
        %v760 = vpop.f32.mrb[0].mxu0
        %v761 = vadd.f32 0.0, %v760
        %v762 = vpop.f32.mrb[0].mxu0
        %763 = vmatprep.mubr.f32.mxu0 0.0
        %764 = vmatmul.mubr.f32.gmra.mrb[0].mxu0 %v664
        %v765 = vpop.f32.mrb[0].mxu0
        %v766 = vadd.f32 0.0, %v765
        %v767 = vpop.f32.mrb[0].mxu0
        %768 = vmatprep.mubr.f32.mxu0 0.0
        %769 = vmatmul.mubr.f32.gmra.mrb[0].mxu0 %v667
        %v770 = vpop.f32.mrb[0].mxu0
        %v771 = vadd.f32 0.0, %v770
        %v772 = vpop.f32.mrb[0].mxu0
        %773 = vdwg.mxu0
        %774 = vst [vmem:[#allocation4] sm:$0xff] 0.0
        %775 = vst [vmem:[#allocation4 + $0x8] sm:$0xff] 0.0
        %776 = vst [vmem:[#allocation4 + $0x10] sm:$0xff] 0.0
        %777 = vst [vmem:[#allocation4 + $0x18] sm:$0xff] 0.0
        %779 = vrot.lane.b32.xlu0 %v736, 11
        %v780 = vpop.permute.xlu0 %779
        %vm782 = vcmask 154712
        %783 = vst.msk [vmem:[#allocation4] sm:$0xff] %vm782, %v780
        %785 = vrot.lane.b32.xlu0 %v741, 21
        %v786 = vpop.permute.xlu0 %785
        %vm788 = vcmask 236712
        %789 = vst.msk [vmem:[#allocation4] sm:$0xff] %vm788, %v786
        %791 = vrot.lane.b32.xlu0 %v746, 31
        %v792 = vpop.permute.xlu0 %791
        %vm794 = vcmask 318712
        %795 = vst.msk [vmem:[#allocation4] sm:$0xff] %vm794, %v792
        %797 = vrot.lane.b32.xlu0 %v751, 41
        %v798 = vpop.permute.xlu0 %797
        %vm800 = vcmask 400712
        %801 = vst.msk [vmem:[#allocation4] sm:$0xff] %vm800, %v798
        %803 = vrot.lane.b32.xlu0 %v756, 51
        %v804 = vpop.permute.xlu0 %803
        %vm806 = vcmask 482712
        %807 = vst.msk [vmem:[#allocation4] sm:$0xff] %vm806, %v804
        %809 = vrot.lane.b32.xlu0 %v761, 61
        %v810 = vpop.permute.xlu0 %809
        %vm812 = vcmask 564712
        %813 = vst.msk [vmem:[#allocation4] sm:$0xff] %vm812, %v810
        %815 = vrot.lane.b32.xlu0 %v766, 71
        %v816 = vpop.permute.xlu0 %815
        %vm818 = vcmask 646712
        %819 = vst.msk [vmem:[#allocation4] sm:$0xff] %vm818, %v816
        %821 = vrot.lane.b32.xlu0 %v771, 81
        %v822 = vpop.permute.xlu0 %821
        %vm824 = vcmask 728712
        %825 = vst.msk [vmem:[#allocation4] sm:$0xff] %vm824, %v822
        %v826 = vld [vmem:[#allocation4] sm:$0xff]
        %v827 = vld [vmem:[#allocation4 + $0x10] sm:$0xff]
        %v828 = vpack.c.bf16 %v827, %v826
        %829 = vst [vmem:[#allocation5] sm:$0xff] %v828
        %v830 = vld [vmem:[#allocation4] sm:$0xff]
        %v831 = vld [vmem:[#allocation4 + $0x8] sm:$0xff]
        %v832 = vld [vmem:[#allocation4 + $0x10] sm:$0xff]
        %v833 = vld [vmem:[#allocation4 + $0x18] sm:$0xff]
        %v834 = vpack.c.bf16 %v832, %v830
        %v835 = vpack.c.bf16 %v833, %v831
        %838 = vrot.lane.b32.xlu0 %v834, 127
        %v839 = vpop.permute.xlu0 %838
        %840 = vrot.lane.b32.xlu0 %v835, 127
        %v841 = vpop.permute.xlu0 %840
        %v842 = vsel %vm278, %v839, %v841
        %844 = vst [vmem:[#allocation5 + $0x8] sm:$0xff] %v842
        %v845 = vld [vmem:[#allocation4] sm:$0xff]
        %v846 = vld [vmem:[#allocation4 + $0x8] sm:$0xff]
        %v847 = vld [vmem:[#allocation4 + $0x10] sm:$0xff]
        %v848 = vld [vmem:[#allocation4 + $0x18] sm:$0xff]
        %v849 = vpack.c.bf16 %v847, %v845
        %v850 = vpack.c.bf16 %v848, %v846
        %853 = vrot.lane.b32.xlu0 %v849, 126
        %v854 = vpop.permute.xlu0 %853
        %855 = vrot.lane.b32.xlu0 %v850, 126
        %v856 = vpop.permute.xlu0 %855
        %v857 = vsel %vm296, %v854, %v856
        %859 = vst [vmem:[#allocation5 + $0x10] sm:$0xff] %v857
        %v860 = vld [vmem:[#allocation4] sm:$0xff]
        %v861 = vld [vmem:[#allocation4 + $0x8] sm:$0xff]
        %v862 = vld [vmem:[#allocation4 + $0x10] sm:$0xff]
        %v863 = vld [vmem:[#allocation4 + $0x18] sm:$0xff]
        %v864 = vpack.c.bf16 %v862, %v860
        %v865 = vpack.c.bf16 %v863, %v861
        %868 = vrot.lane.b32.xlu0 %v864, 118
        %v869 = vpop.permute.xlu0 %868
        %870 = vrot.lane.b32.xlu0 %v865, 118
        %v871 = vpop.permute.xlu0 %870
        %vm872 = vcmask 965632
        %v873 = vsel %vm872, %v869, %v871
        %875 = vst [vmem:[#allocation5 + $0x18] sm:$0xff] %v873
        %v876 = vld [vmem:[#allocation4] sm:$0xff]
        %v877 = vld [vmem:[#allocation4 + $0x8] sm:$0xff]
        %v878 = vld [vmem:[#allocation4 + $0x10] sm:$0xff]
        %v879 = vld [vmem:[#allocation4 + $0x18] sm:$0xff]
        %v880 = vpack.c.bf16 %v878, %v876
        %v881 = vpack.c.bf16 %v879, %v877
        %884 = vrot.lane.b32.xlu0 %v880, 117
        %v885 = vpop.permute.xlu0 %884
        %886 = vrot.lane.b32.xlu0 %v881, 117
        %v887 = vpop.permute.xlu0 %886
        %vm888 = vcmask 957440
        %v889 = vsel %vm888, %v885, %v887
        %891 = vst [vmem:[#allocation5 + $0x20] sm:$0xff] %v889
        %v892 = vld [vmem:[#allocation4] sm:$0xff]
        %v893 = vld [vmem:[#allocation4 + $0x8] sm:$0xff]
        %v894 = vld [vmem:[#allocation4 + $0x10] sm:$0xff]
        %v895 = vld [vmem:[#allocation4 + $0x18] sm:$0xff]
        %v896 = vpack.c.bf16 %v894, %v892
        %v897 = vpack.c.bf16 %v895, %v893
        %900 = vrot.lane.b32.xlu0 %v896, 116
        %v901 = vpop.permute.xlu0 %900
        %902 = vrot.lane.b32.xlu0 %v897, 116
        %v903 = vpop.permute.xlu0 %902
        %vm904 = vcmask 949248
        %v905 = vsel %vm904, %v901, %v903
        %907 = vst [vmem:[#allocation5 + $0x28] sm:$0xff] %v905
        %v908 = vld [vmem:[#allocation4] sm:$0xff]
        %v909 = vld [vmem:[#allocation4 + $0x8] sm:$0xff]
        %v910 = vld [vmem:[#allocation4 + $0x10] sm:$0xff]
        %v911 = vld [vmem:[#allocation4 + $0x18] sm:$0xff]
        %v912 = vpack.c.bf16 %v910, %v908
        %v913 = vpack.c.bf16 %v911, %v909
        %916 = vrot.lane.b32.xlu0 %v912, 108
        %v917 = vpop.permute.xlu0 %916
        %918 = vrot.lane.b32.xlu0 %v913, 108
        %v919 = vpop.permute.xlu0 %918
        %v920 = vsel %vm350, %v917, %v919
        %922 = vst [vmem:[#allocation5 + $0x30] sm:$0xff] %v920
        %v923 = vld [vmem:[#allocation4] sm:$0xff]
        %v924 = vld [vmem:[#allocation4 + $0x8] sm:$0xff]
        %v925 = vld [vmem:[#allocation4 + $0x10] sm:$0xff]
        %v926 = vld [vmem:[#allocation4 + $0x18] sm:$0xff]
        %v927 = vpack.c.bf16 %v925, %v923
        %v928 = vpack.c.bf16 %v926, %v924
        %931 = vrot.lane.b32.xlu0 %v927, 107
        %v932 = vpop.permute.xlu0 %931
        %933 = vrot.lane.b32.xlu0 %v928, 107
        %v934 = vpop.permute.xlu0 %933
        %vm935 = vcmask 875520
        %v936 = vsel %vm935, %v932, %v934
        %938 = vst [vmem:[#allocation5 + $0x38] sm:$0xff] %v936
        %v939 = vld [vmem:[#allocation4] sm:$0xff]
        %v940 = vld [vmem:[#allocation4 + $0x8] sm:$0xff]
        %v941 = vld [vmem:[#allocation4 + $0x10] sm:$0xff]
        %v942 = vld [vmem:[#allocation4 + $0x18] sm:$0xff]
        %v943 = vpack.c.bf16 %v941, %v939
        %v944 = vpack.c.bf16 %v942, %v940
        %947 = vrot.lane.b32.xlu0 %v943, 106
        %v948 = vpop.permute.xlu0 %947
        %949 = vrot.lane.b32.xlu0 %v944, 106
        %v950 = vpop.permute.xlu0 %949
        %vm951 = vcmask 867328
        %v952 = vsel %vm951, %v948, %v950
        %954 = vst [vmem:[#allocation5 + $0x40] sm:$0xff] %v952
        %v955 = vld [vmem:[%s3] sm:$0xff]
        %v956 = vld [vmem:[%s3 + $0x8] sm:$0xff]
        %v957 = vld [vmem:[#allocation5] sm:$0xff]
        %v958 = vld [vmem:[#allocation5 + $0x8] sm:$0xff]
        %v959 = vld [vmem:[#allocation5 + $0x10] sm:$0xff]
        %v960 = vld [vmem:[#allocation5 + $0x18] sm:$0xff]
        %v961 = vld [vmem:[#allocation5 + $0x20] sm:$0xff]
        %v962 = vld [vmem:[#allocation5 + $0x28] sm:$0xff]
        %v963 = vld [vmem:[#allocation5 + $0x30] sm:$0xff]
        %v964 = vld [vmem:[#allocation5 + $0x38] sm:$0xff]
        %v965 = vld [vmem:[#allocation5 + $0x40] sm:$0xff]
        %v966 = vld [vmem:[%s4] sm:$0xff]
        %v967 = vld [vmem:[%s4 + $0x8] sm:$0xff]
        %969 = vset.pattern.permute.xlu0 0
        %970 = vperm.xlu0 %969, %v966
        %v971 = vpop.permute.xlu0 %970
        %974 = vset.pattern.permute.xlu0 0
        %975 = vperm.xlu0 %974, %v967
        %v976 = vpop.permute.xlu0 %975
        %v980 = vunpack.c.l.b16 %v955
        %v981 = vunpack.c.h.b16 %v955
        %v982 = vunpack.c.l.b16 %v956
        %v983 = vunpack.c.h.b16 %v956
        %v984 = vpack.c.b16 %v982, %v980
        %v985 = vpack.c.b16 %v983, %v981
        %v988 = vsel %vm454, %v985, 0
        %990 = vmatprep.subr.bf16.mxu0 0
        %991 = vmatpush1.bf16.msra.mxu0 %v957
        %992 = vmatprep.subr.bf16.mxu0 0
        %993 = vmatpush1.bf16.msra.mxu0 %v958
        %994 = vmatprep.subr.bf16.mxu0 0
        %995 = vmatpush1.bf16.msra.mxu0 %v959
        %996 = vmatprep.subr.bf16.mxu0 0
        %997 = vmatpush1.bf16.msra.mxu0 %v960
        %998 = vmatprep.subr.bf16.mxu0 0
        %999 = vmatpush1.bf16.msra.mxu0 %v961
        %1000 = vmatprep.subr.bf16.mxu0 0
        %1001 = vmatpush1.bf16.msra.mxu0 %v962
        %1002 = vmatprep.subr.bf16.mxu0 0
        %1003 = vmatpush1.bf16.msra.mxu0 %v963
        %1004 = vmatprep.subr.bf16.mxu0 0
        %1005 = vmatpush1.bf16.msra.mxu0 %v964
        %1006 = vmatprep.subr.bf16.mxu0 0
        %1007 = vmatpush1.bf16.msra.mxu0 %v965
        %1008 = vmatprep.subr.bf16.mxu0 0
        %1009 = vmatpush1.bf16.msra.mxu0 0
        %1010 = vmatprep.subr.bf16.mxu0 0
        %1011 = vmatpush1.bf16.msra.mxu0 0
        %1012 = vmatprep.subr.bf16.mxu0 0
        %1013 = vmatpush1.bf16.msra.mxu0 0
        %1014 = vmatprep.subr.bf16.mxu0 0
        %1015 = vmatpush1.bf16.msra.mxu0 0
        %1016 = vmatprep.subr.bf16.mxu0 0
        %1017 = vmatpush1.bf16.msra.mxu0 0
        %1018 = vmatprep.subr.bf16.mxu0 0
        %1019 = vmatpush1.bf16.msra.mxu0 0
        %1020 = vmatprep.subr.bf16.mxu0 0
        %1021 = vmatpush1.bf16.msra.mxu0 0
        %1022 = vmatprep.mubr.bf16.mxu0 %v988
        %1023 = vmatmul.mubr.bf16.gmra.mrb[0].mxu0 %v984
        %v1024 = vpop.f32.mrb[0].mxu0
        %v1025 = vadd.f32 %v971, %v1024
        %v1026 = vpop.f32.mrb[0].mxu0
        %v1027 = vpop.f32.mrb[0].mxu0
        %v1028 = vadd.f32 %v976, %v1027
        %v1029 = vpop.f32.mrb[0].mxu0
        %1030 = vdwg.mxu0
        %v1031 = vmax.f32 %v1025, 0.0
        %v1032 = vmax.f32 %v1028, 0.0
        %1035 = vrot.lane.b32.xlu0 %v1031, 127
        %v1036 = vpop.permute.xlu0 %1035
        %1037 = vrot.lane.b32.xlu0 %v1032, 127
        %v1038 = vpop.permute.xlu0 %1037
        %v1041 = vmax.f32 %v1031, %v1036
        %v1042 = vmax.f32 %v1032, %v1038
        %1045 = vrot.lane.b32.xlu0 %v1041, 118
        %v1046 = vpop.permute.xlu0 %1045
        %1047 = vrot.lane.b32.xlu0 %v1042, 118
        %v1048 = vpop.permute.xlu0 %1047
        %v1051 = vmax.f32 %v1041, %v1046
        %v1052 = vmax.f32 %v1042, %v1048
        %vm1053 = vcmask 64512
        %1054 = vst.msk [vmem:[#allocation6] sm:$0xff] %vm1053, %v1051
        %1055 = vst.msk [vmem:[#allocation6 + $0x8] sm:$0xff] %vm1053, %v1052
        %1058 = vrot.lane.b32.xlu0 %v1051, 108
        %v1059 = vpop.permute.xlu0 %1058
        %1060 = vrot.lane.b32.xlu0 %v1052, 108
        %v1061 = vpop.permute.xlu0 %1060
        %1064 = vst.msk [vmem:[#allocation6 + $0x10] sm:$0xff] %vm1053, %v1059
        %1065 = vst.msk [vmem:[#allocation6 + $0x18] sm:$0xff] %vm1053, %v1061
        %1066 = vrot.lane.b32.xlu0 %v1051, 88
        %v1067 = vpop.permute.xlu0 %1066
        %1068 = vrot.lane.b32.xlu0 %v1052, 88
        %v1069 = vpop.permute.xlu0 %1068
        %1072 = vst.msk [vmem:[#allocation6 + $0x20] sm:$0xff] %vm1053, %v1067
        %1073 = vst.msk [vmem:[#allocation6 + $0x28] sm:$0xff] %vm1053, %v1069
        %1074 = vrot.lane.b32.xlu0 %v1051, 68
        %v1075 = vpop.permute.xlu0 %1074
        %1076 = vrot.lane.b32.xlu0 %v1052, 68
        %v1077 = vpop.permute.xlu0 %1076
        %1080 = vst.msk [vmem:[#allocation6 + $0x30] sm:$0xff] %vm1053, %v1075
        %1081 = vst.msk [vmem:[#allocation6 + $0x38] sm:$0xff] %vm1053, %v1077
        %v1082 = vld [vmem:[#allocation6] sm:$0xff]
        %v1083 = vld [vmem:[#allocation6 + $0x8] sm:$0xff]
        %v1084 = vld [vmem:[#allocation6 + $0x10] sm:$0xff]
        %v1085 = vld [vmem:[#allocation6 + $0x18] sm:$0xff]
        %v1086 = vld [vmem:[#allocation6 + $0x20] sm:$0xff]
        %v1087 = vld [vmem:[#allocation6 + $0x28] sm:$0xff]
        %v1088 = vld [vmem:[#allocation6 + $0x30] sm:$0xff]
        %v1089 = vld [vmem:[#allocation6 + $0x38] sm:$0xff]
        %v1091 = vsel %vm1053, %v1082, 0
        %v1094 = vsel %vm1053, %v1083, 0
        %v1097 = vsel %vm1053, %v1084, 0
        %v1100 = vsel %vm1053, %v1085, 0
        %v1103 = vsel %vm1053, %v1086, 0
        %v1106 = vsel %vm1053, %v1087, 0
        %v1109 = vsel %vm1053, %v1088, 0
        %v1112 = vsel %vm1053, %v1089, 0
        %1114 = vmatprep.subr.mxu0 0.0
        %1115 = vmatpush1.msra.mxu0 %v643
        %1116 = vmatprep.subr.mxu0 0.0
        %1117 = vmatpush1.msra.mxu0 0.0
        %1118 = vmatprep.subr.mxu0 0.0
        %1119 = vmatpush1.msra.mxu0 0.0
        %1120 = vmatprep.subr.mxu0 0.0
        %1121 = vmatpush1.msra.mxu0 0.0
        %1122 = vmatprep.subr.mxu0 0.0
        %1123 = vmatpush1.msra.mxu0 0.0
        %1124 = vmatprep.subr.mxu0 0.0
        %1125 = vmatpush1.msra.mxu0 0.0
        %1126 = vmatprep.subr.mxu0 0.0
        %1127 = vmatpush1.msra.mxu0 0.0
        %1128 = vmatprep.subr.mxu0 0.0
        %1129 = vmatpush1.msra.mxu0 0.0
        %1130 = vmatprep.subr.mxu0 0.0
        %1131 = vmatpush1.msra.mxu0 0.0
        %1132 = vmatprep.subr.mxu0 0.0
        %1133 = vmatpush1.msra.mxu0 0.0
        %1134 = vmatprep.subr.mxu0 0.0
        %1135 = vmatpush1.msra.mxu0 0.0
        %1136 = vmatprep.subr.mxu0 0.0
        %1137 = vmatpush1.msra.mxu0 0.0
        %1138 = vmatprep.subr.mxu0 0.0
        %1139 = vmatpush1.msra.mxu0 0.0
        %1140 = vmatprep.subr.mxu0 0.0
        %1141 = vmatpush1.msra.mxu0 0.0
        %1142 = vmatprep.subr.mxu0 0.0
        %1143 = vmatpush1.msra.mxu0 0.0
        %1144 = vmatprep.subr.mxu0 0.0
        %1145 = vmatpush1.msra.mxu0 0.0
        %1146 = vmatprep.subr.mxu0 0.0
        %1147 = vmatpush1.msra.mxu0 0.0
        %1148 = vmatprep.subr.mxu0 0.0
        %1149 = vmatpush1.msra.mxu0 0.0
        %1150 = vmatprep.subr.mxu0 0.0
        %1151 = vmatpush1.msra.mxu0 0.0
        %1152 = vmatprep.subr.mxu0 0.0
        %1153 = vmatpush1.msra.mxu0 0.0
        %1154 = vmatprep.subr.mxu0 0.0
        %1155 = vmatpush1.msra.mxu0 0.0
        %1156 = vmatprep.subr.mxu0 0.0
        %1157 = vmatpush1.msra.mxu0 0.0
        %1158 = vmatprep.subr.mxu0 0.0
        %1159 = vmatpush1.msra.mxu0 0.0
        %1160 = vmatprep.subr.mxu0 0.0
        %1161 = vmatpush1.msra.mxu0 0.0
        %1162 = vmatprep.subr.mxu0 0.0
        %1163 = vmatpush1.msra.mxu0 0.0
        %1164 = vmatprep.subr.mxu0 0.0
        %1165 = vmatpush1.msra.mxu0 0.0
        %1166 = vmatprep.subr.mxu0 0.0
        %1167 = vmatpush1.msra.mxu0 0.0
        %1168 = vmatprep.subr.mxu0 0.0
        %1169 = vmatpush1.msra.mxu0 0.0
        %1170 = vmatprep.subr.mxu0 0.0
        %1171 = vmatpush1.msra.mxu0 0.0
        %1172 = vmatprep.subr.mxu0 0.0
        %1173 = vmatpush1.msra.mxu0 0.0
        %1174 = vmatprep.subr.mxu0 0.0
        %1175 = vmatpush1.msra.mxu0 0.0
        %1176 = vmatprep.subr.mxu0 0.0
        %1177 = vmatpush1.msra.mxu0 0.0
        %1178 = vmatprep.mubr.f32.mxu0 0.0
        %1179 = vmatmul.mubr.f32.gmra.mrb[0].mxu0 %v1091
        %v1180 = vpop.f32.mrb[0].mxu0
        %v1181 = vadd.f32 0.0, %v1180
        %v1182 = vpop.f32.mrb[0].mxu0
        %1183 = vmatprep.mubr.f32.mxu0 0.0
        %1184 = vmatmul.mubr.f32.gmra.mrb[0].mxu0 %v1094
        %v1185 = vpop.f32.mrb[0].mxu0
        %v1186 = vadd.f32 0.0, %v1185
        %v1187 = vpop.f32.mrb[0].mxu0
        %1188 = vmatprep.mubr.f32.mxu0 0.0
        %1189 = vmatmul.mubr.f32.gmra.mrb[0].mxu0 %v1097
        %v1190 = vpop.f32.mrb[0].mxu0
        %v1191 = vadd.f32 0.0, %v1190
        %v1192 = vpop.f32.mrb[0].mxu0
        %1193 = vmatprep.mubr.f32.mxu0 0.0
        %1194 = vmatmul.mubr.f32.gmra.mrb[0].mxu0 %v1100
        %v1195 = vpop.f32.mrb[0].mxu0
        %v1196 = vadd.f32 0.0, %v1195
        %v1197 = vpop.f32.mrb[0].mxu0
        %1198 = vmatprep.mubr.f32.mxu0 0.0
        %1199 = vmatmul.mubr.f32.gmra.mrb[0].mxu0 %v1103
        %v1200 = vpop.f32.mrb[0].mxu0
        %v1201 = vadd.f32 0.0, %v1200
        %v1202 = vpop.f32.mrb[0].mxu0
        %1203 = vmatprep.mubr.f32.mxu0 0.0
        %1204 = vmatmul.mubr.f32.gmra.mrb[0].mxu0 %v1106
        %v1205 = vpop.f32.mrb[0].mxu0
        %v1206 = vadd.f32 0.0, %v1205
        %v1207 = vpop.f32.mrb[0].mxu0
        %1208 = vmatprep.mubr.f32.mxu0 0.0
        %1209 = vmatmul.mubr.f32.gmra.mrb[0].mxu0 %v1109
        %v1210 = vpop.f32.mrb[0].mxu0
        %v1211 = vadd.f32 0.0, %v1210
        %v1212 = vpop.f32.mrb[0].mxu0
        %1213 = vmatprep.mubr.f32.mxu0 0.0
        %1214 = vmatmul.mubr.f32.gmra.mrb[0].mxu0 %v1112
        %v1215 = vpop.f32.mrb[0].mxu0
        %v1216 = vadd.f32 0.0, %v1215
        %v1217 = vpop.f32.mrb[0].mxu0
        %1218 = vdwg.mxu0
        %1219 = vst.msk [vmem:[%s242] sm:$0xff] %vm621, %v1181
        %1220 = vst.msk [vmem:[%s242 + $0x8] sm:$0xff] %vm621, %v1186
        %1223 = vrot.lane.b32.xlu0 %v1191, 4
        %v1224 = vpop.permute.xlu0 %1223
        %1225 = vrot.lane.b32.xlu0 %v1196, 4
        %v1226 = vpop.permute.xlu0 %1225
        %vm1229 = vcmask 64544
        %1230 = vst.msk [vmem:[%s242] sm:$0xff] %vm1229, %v1224
        %1231 = vst.msk [vmem:[%s242 + $0x8] sm:$0xff] %vm1229, %v1226
        %1234 = vrot.lane.b32.xlu0 %v1201, 8
        %v1235 = vpop.permute.xlu0 %1234
        %1236 = vrot.lane.b32.xlu0 %v1206, 8
        %v1237 = vpop.permute.xlu0 %1236
        %vm1240 = vcmask 97344
        %1241 = vst.msk [vmem:[%s242] sm:$0xff] %vm1240, %v1235
        %1242 = vst.msk [vmem:[%s242 + $0x8] sm:$0xff] %vm1240, %v1237
        %1245 = vrot.lane.b32.xlu0 %v1211, 12
        %v1246 = vpop.permute.xlu0 %1245
        %1247 = vrot.lane.b32.xlu0 %v1216, 12
        %v1248 = vpop.permute.xlu0 %1247
        %vm1251 = vcmask 130144
        %1252 = vst.msk [vmem:[%s242] sm:$0xff] %vm1251, %v1246
        %1253 = vst.msk [vmem:[%s242 + $0x8] sm:$0xff] %vm1251, %v1248
        %s1254 = sand.u32 %s140, 1
        %s1255 = scalar_lea.sflag [#allocation9], %s1254
        %s1256 = sand.u32 %s140, 1
        %s1257 = smul.addr %s1256, 16
        %s1258 = scalar_lea.vmem [#allocation10], %s1257
        // Predicated region
        $region45: #{tpu_custom_call.1} parent=39 // pred_check
          %p1259 = pneg %p150
        $region46: #{tpu_custom_call.1} parent=39 // pred_check_branch
          %1261 = sbr.rel (%p1259) target = $region48
        $region47: #{tpu_custom_call.1} parent=39 // pred_region
          %s1263 = ssub.s32 256, 256
          %1264 = vsyncadd %s1255, %s1263
          %s1265 = smul.addr %s22, 2
          %s1266 = smul.addr %s1265, 128
          %s1267 = scalar_lea.hbm %s5, %s1266
          %s1268 = sshll.u32 %s1258, 4
          %s1269 = int_to_ptr.vmem [resolvable:$true] %s1268
          %1274 = dma.vmem_to_hbm [thread:$0]  %s1269, 256, %s1267, %s1255, 128, 128, 8
        $region48: #{tpu_custom_call.1} parent=39 // pred_fallthru
          _
      $region40: #{tpu_custom_call.1} parent=5 // pred_fallthru
        _
      %p1275 = scmp.le.s32.totalorder 2, %s17
      // Predicated region
      $region49: #{tpu_custom_call.1} parent=5 // pred_check
        %p1276 = pneg %p1275
      $region50: #{tpu_custom_call.1} parent=5 // pred_check_branch
        %1278 = sbr.rel (%p1276) target = $region52
      $region51: #{tpu_custom_call.1} parent=5 // pred_region
        %s1279 = ssub.s32 %s17, 2
        // Predicated region
        $region53: #{tpu_custom_call.1} parent=51 // pred_check
          %p1280 = pneg %p156
        $region54: #{tpu_custom_call.1} parent=51 // pred_check_branch
          %1282 = sbr.rel (%p1280) target = $region56
        $region55: #{tpu_custom_call.1} parent=51 // pred_region
          %s1283 = sand.u32 %s141, 1
          %s1284 = scalar_lea.sflag [#allocation9], %s1283
          %s1285 = sand.u32 %s141, 1
          %s1286 = smul.addr %s1285, 16
          %s1287 = scalar_lea.vmem [#allocation10], %s1286
          %1288 = dma.done %s1284, 256
        $region56: #{tpu_custom_call.1} parent=51 // pred_fallthru
          _
      $region52: #{tpu_custom_call.1} parent=5 // pred_fallthru
        _
    $region6: #{tpu_custom_call.1} parent=1 // loop_footer
      %s21 = sadd.s32 1, %s17
    $region7: #{tpu_custom_call.1} parent=1 // loop_footer_branch
      %16 = sbr.rel target = $region3
    $region8: #{tpu_custom_call.1} parent=1 // loop_exit
      _
    %1289 = vsyncpa [#allocation8], 1
    %s1290 = scalar_lea.sflag [#allocation8], 1
    %1291 = vsyncpa %s1290, 1
    %1292 = vsyncpa [#allocation9], 1
    %s1293 = scalar_lea.sflag [#allocation9], 1
    %1294 = vsyncpa %s1293, 1

</llo_original>
